<compile_context>
chip_gen: v7x
topology: tpu7x:2x2x1
jax: 0.10.0
libtpu: 0.0.40
codegen_flags: <defaults>
</compile_context>

<pallas_src>
import functools

import jax
import jax.numpy as jnp
from jax import lax
from jax.experimental import pallas as pl
from jax.experimental.pallas import tpu as pltpu

NDF = 8          # discriminator base width (PyTorch DCGAN uses 64; small here)
KSIZE = 4
BN_EPS = 1e-5
TILE_M = 512                       # lane-aligned M tile for the large-M fallback
SINGLE_BLOCK_VMEM_BYTES = 8 << 20  # fuse into one block if operands fit here


def _lrelu(y):
    # LeakyReLU(0.2) as a single VPU max (y >= 0.2*y iff y >= 0).
    return jnp.maximum(y, 0.2 * y)


# ----------------------------------------------------------------------------
# Single-block kernel: matmul + (optional) in-register batch-stats BN + LReLU.
#   y^T (Cout, M) = W (Cout, K) @ patches^T (K, M)
# ----------------------------------------------------------------------------
def conv_single_kernel(pT_ref, w_ref, g_ref, b_ref, o_ref, *, has_bn, has_act):
    y = jnp.dot(w_ref[...], pT_ref[...], preferred_element_type=jnp.float32)
    if has_bn:
        inv_m = 1.0 / y.shape[1]
        mean = jnp.sum(y, axis=1, keepdims=True) * inv_m
        var = jnp.sum(y * y, axis=1, keepdims=True) * inv_m - mean * mean
        y = (y - mean) * lax.rsqrt(jnp.maximum(var, 0.0) + BN_EPS) * g_ref[...] \
            + b_ref[...]
    if has_act:
        y = _lrelu(y)
    o_ref[...] = y


# ----------------------------------------------------------------------------
# Tiled fallback for large M: pass 0 accumulates per-channel sum / sum-of-sq
# across all M tiles (VMEM scratch), pass 1 recomputes the matmul and applies
# normalize + LeakyReLU.  No-BN layers use a single "parallel" M axis.
# ----------------------------------------------------------------------------
def conv_tiled_kernel(pT_ref, w_ref, g_ref, b_ref, o_ref, sum_ref, ssq_ref, *,
                      has_bn, has_act, m_total):
    y = jnp.dot(w_ref[...], pT_ref[...], preferred_element_type=jnp.float32)

    if not has_bn:
        o_ref[...] = _lrelu(y) if has_act else y
        return

    p = pl.program_id(0)          # pass index
    i = pl.program_id(1)          # M tile index

    @pl.when((p == 0) & (i == 0))
    def _init():
        sum_ref[...] = jnp.zeros_like(sum_ref)
        ssq_ref[...] = jnp.zeros_like(ssq_ref)

    @pl.when(p == 0)
    def _accumulate():
        sum_ref[...] = sum_ref[...] + jnp.sum(y, axis=1, keepdims=True)
        ssq_ref[...] = ssq_ref[...] + jnp.sum(y * y, axis=1, keepdims=True)
        o_ref[...] = y            # placeholder; overwritten in pass 1

    @pl.when(p == 1)
    def _apply():
        inv_m = 1.0 / m_total
        mean = sum_ref[...] * inv_m
        var = ssq_ref[...] * inv_m - mean * mean      # biased batch variance
        scale = lax.rsqrt(jnp.maximum(var, 0.0) + BN_EPS) * g_ref[...]
        yn = (y - mean) * scale + b_ref[...]
        if has_act:
            yn = _lrelu(yn)
        o_ref[...] = yn


# ----------------------------------------------------------------------------
# Fused tail: Conv(4N->8N, s2, p1) + BN + LeakyReLU, then Conv(8N->1, 4x4
# VALID).  Because the final conv spans the entire 4x4 map it is just a
# per-batch weighted reduce of y4^T — no im2col / reshape needed in-kernel.
# ----------------------------------------------------------------------------
def tail_kernel(p4_ref, w4_ref, g_ref, b_ref, w5t_ref, sel_ref, o_ref):
    y = jnp.dot(w4_ref[...], p4_ref[...], preferred_element_type=jnp.float32)  # (8N, M4)
    inv_m = 1.0 / y.shape[1]
    mean = jnp.sum(y, axis=1, keepdims=True) * inv_m
    var = jnp.sum(y * y, axis=1, keepdims=True) * inv_m - mean * mean
    y = (y - mean) * lax.rsqrt(jnp.maximum(var, 0.0) + BN_EPS) * g_ref[...] + b_ref[...]
    y = _lrelu(y)
    # final conv: elementwise multiply by tiled 4x4 weights, sum channels
    # (sublanes), then collapse each batch's 16 lanes via a tiny selector dot.
    t = y * w5t_ref[...]                                   # (8N, M4)
    colsum = jnp.sum(t, axis=0, keepdims=True)             # (1, M4)
    o_ref[...] = jnp.dot(colsum, sel_ref[...],
                         preferred_element_type=jnp.float32)   # (1, N)


# ----------------------------------------------------------------------------
# Glue: transposed im2col.  K rows ordered (c, kh, kw) to match PyTorch's
# weight.reshape(Cout, -1); M columns ordered (n, hout, wout).
# ----------------------------------------------------------------------------
def im2col_T(x_cnhw, ksize, stride, pad):
    x = x_cnhw.astype(jnp.bfloat16)                        # bf16 MXU operand
    C, N, H, W = x.shape
    xp = jnp.pad(x, ((0, 0), (0, 0), (pad, pad), (pad, pad)))
    Hout = (H + 2 * pad - ksize) // stride + 1
    Wout = (W + 2 * pad - ksize) // stride + 1
    cols = []
    for kh in range(ksize):
        for kw in range(ksize):
            cols.append(xp[:, :, kh:kh + stride * Hout:stride,
                              kw:kw + stride * Wout:stride])   # (C,N,Hout,Wout)
    p = jnp.stack(cols, axis=1)                                # (C, k*k, N, Hout, Wout)
    return p.reshape(C * ksize * ksize, N * Hout * Wout), (N, Hout, Wout)


def conv_layer(x_cnhw, w_oihw, gamma, beta, *, stride, pad, has_bn, has_act):
    patchesT, (N, Hout, Wout) = im2col_T(x_cnhw, KSIZE, stride, pad)
    K, M = patchesT.shape
    Cout = w_oihw.shape[0]
    wmat = w_oihw.reshape(Cout, K).astype(jnp.bfloat16)
    g2 = gamma.reshape(Cout, 1).astype(jnp.float32)
    b2 = beta.reshape(Cout, 1).astype(jnp.float32)

    # rough double-buffered VMEM footprint of the fused single block
    vmem_need = 2 * (K * M * 2 + Cout * M * 4) + Cout * K * 2

    if vmem_need <= SINGLE_BLOCK_VMEM_BYTES or M % TILE_M != 0:
        # one grid step: matmul + BN + LReLU fused, no stats recompute.
        kernel = functools.partial(conv_single_kernel,
                                   has_bn=has_bn, has_act=has_act)
        out = pl.pallas_call(
            kernel,
            out_shape=jax.ShapeDtypeStruct((Cout, M), jnp.float32),
            grid_spec=pltpu.PrefetchScalarGridSpec(
                num_scalar_prefetch=0,
                grid=(1,),
                in_specs=[
                    pl.BlockSpec((K, M), lambda i: (0, 0)),       # patches^T (bf16)
                    pl.BlockSpec((Cout, K), lambda i: (0, 0)),    # weights   (bf16)
                    pl.BlockSpec((Cout, 1), lambda i: (0, 0)),    # gamma
                    pl.BlockSpec((Cout, 1), lambda i: (0, 0)),    # beta
                ],
                out_specs=pl.BlockSpec((Cout, M), lambda i: (0, 0)),
            ),
            compiler_params=pltpu.CompilerParams(
                dimension_semantics=("arbitrary",)),
        )(patchesT, wmat, g2, b2)
        return out.reshape(Cout, N, Hout, Wout)

    # ---- large-M fallback: tile M on the grid --------------------------------
    nt = M // TILE_M
    kernel = functools.partial(conv_tiled_kernel, has_bn=has_bn, has_act=has_act,
                               m_total=float(M))
    if has_bn:
        grid = (2, nt)                       # (pass, M tile)
        tile_map = lambda p, i: (0, i)
        bcast_map = lambda p, i: (0, 0)
        sem = ("arbitrary", "arbitrary")     # sequential: cross-tile stats
    else:
        grid = (nt,)
        tile_map = lambda i: (0, i)
        bcast_map = lambda i: (0, 0)
        sem = ("parallel",)                  # independent tiles -> megacore

    out = pl.pallas_call(
        kernel,
        out_shape=jax.ShapeDtypeStruct((Cout, M), jnp.float32),
        grid_spec=pltpu.PrefetchScalarGridSpec(
            num_scalar_prefetch=0,
            grid=grid,
            in_specs=[
                pl.BlockSpec((K, TILE_M), tile_map),      # patches^T (bf16)
                pl.BlockSpec((Cout, K), bcast_map),       # weights   (bf16)
                pl.BlockSpec((Cout, 1), bcast_map),       # gamma
                pl.BlockSpec((Cout, 1), bcast_map),       # beta
            ],
            out_specs=pl.BlockSpec((Cout, TILE_M), tile_map),
            scratch_shapes=[pltpu.VMEM((Cout, 1), jnp.float32),   # sum
                            pltpu.VMEM((Cout, 1), jnp.float32)],  # sum of sq
        ),
        compiler_params=pltpu.CompilerParams(dimension_semantics=sem),
    )(patchesT, wmat, g2, b2)
    return out.reshape(Cout, N, Hout, Wout)    # stay channel-major (CNHW)


def tail_fused(x_cnhw, w4, g4, b4, w5):
    p4, (N, H4, W4) = im2col_T(x_cnhw, KSIZE, 2, 1)        # (K4, M4)
    assert H4 == KSIZE and W4 == KSIZE, (H4, W4)            # DCGAN 64x64 geometry
    K4, M4 = p4.shape
    C4 = w4.shape[0]
    w4m = w4.reshape(C4, K4).astype(jnp.bfloat16)
    g4c = g4.reshape(C4, 1).astype(jnp.float32)
    b4c = b4.reshape(C4, 1).astype(jnp.float32)

    # Final 4x4 VALID conv weights, tiled per batch so they line up with the
    # (n, hout, wout) lane ordering of y4^T; selector sums each batch's lanes.
    w5f = w5.reshape(C4, KSIZE * KSIZE).astype(jnp.float32)   # (C4, 16)
    w5t = jnp.tile(w5f, (1, N))                               # (C4, M4)
    sel = (jnp.arange(M4)[:, None] // (H4 * W4)
           == jnp.arange(N)[None, :]).astype(jnp.float32)     # (M4, N)

    out = pl.pallas_call(
        tail_kernel,
        out_shape=jax.ShapeDtypeStruct((1, N), jnp.float32),
        grid_spec=pltpu.PrefetchScalarGridSpec(
            num_scalar_prefetch=0,
            grid=(1,),
            in_specs=[
                pl.BlockSpec((K4, M4), lambda i: (0, 0)),
                pl.BlockSpec((C4, K4), lambda i: (0, 0)),
                pl.BlockSpec((C4, 1), lambda i: (0, 0)),
                pl.BlockSpec((C4, 1), lambda i: (0, 0)),
                pl.BlockSpec((C4, M4), lambda i: (0, 0)),
                pl.BlockSpec((M4, N), lambda i: (0, 0)),
            ],
            out_specs=pl.BlockSpec((1, N), lambda i: (0, 0)),
        ),
        compiler_params=pltpu.CompilerParams(dimension_semantics=("arbitrary",)),
    )(p4, w4m, g4c, b4c, w5t, sel)
    return out.reshape(N)        # explicit shape (N,), no squeeze-all-dims


# ----------------------------------------------------------------------------
# DNet forward
# ----------------------------------------------------------------------------
def init_params(key):
    specs = [  # (C_out, C_in)
        (NDF, 3),
        (NDF * 2, NDF),
        (NDF * 4, NDF * 2),
        (NDF * 8, NDF * 4),
        (1, NDF * 8),
    ]
    params = []
    for co, ci in specs:
        key, wk = jax.random.split(key)
        w = 0.02 * jax.random.normal(wk, (co, ci, KSIZE, KSIZE), jnp.float32)
        gamma = jnp.ones((co,), jnp.float32)    # BatchNorm2d default affine
        beta = jnp.zeros((co,), jnp.float32)
        params.append((w, gamma, beta))
    return params


def dnet_forward(params, x):
    # single relayout to channel-major; everything downstream stays CNHW.
    h = jnp.transpose(x, (1, 0, 2, 3))
    (w1, g1, b1), (w2, g2, b2), (w3, g3, b3), (w4, g4, b4), (w5, _, _) = params
    h = conv_layer(h, w1, g1, b1, stride=2, pad=1, has_bn=False, has_act=True)
    h = conv_layer(h, w2, g2, b2, stride=2, pad=1, has_bn=True, has_act=True)
    h = conv_layer(h, w3, g3, b3, stride=2, pad=1, has_bn=True, has_act=True)
    # TODO(synk): layer 3 could also fold into the fused tail once in-kernel
    # strided im2col of its (C, N, 8, 8) output block is worth the complexity.
    return tail_fused(h, w4, g4, b4, w5)        # (N,)


# ----------------------------------------------------------------------------
# Pure-JAX f32 reference (for correctness check)
# ----------------------------------------------------------------------------
def dnet_reference(params, x):
    def conv(x, w, stride, pad):
        return lax.conv_general_dilated(
            x, w, window_strides=(stride, stride),
            padding=((pad, pad), (pad, pad)),
            dimension_numbers=("NCHW", "OIHW", "NCHW"))

    def bn(x, g, b):
        m = jnp.mean(x, axis=(0, 2, 3), keepdims=True)
        v = jnp.var(x, axis=(0, 2, 3), keepdims=True)
        return (x - m) * lax.rsqrt(v + BN_EPS) * g[None, :, None, None] \
            + b[None, :, None, None]

    def lrelu(x):
        return jnp.where(x > 0, x, 0.2 * x)

    h = lrelu(conv(x, params[0][0], 2, 1))
    h = lrelu(bn(conv(h, params[1][0], 2, 1), params[1][1], params[1][2]))
    h = lrelu(bn(conv(h, params[2][0], 2, 1), params[2][1], params[2][2]))
    h = lrelu(bn(conv(h, params[3][0], 2, 1), params[3][1], params[3][2]))
    h = conv(h, params[4][0], 1, 0)
    return jnp.squeeze(h)


if __name__ == "__main__":
    key = jax.random.PRNGKey(0)
    key, xk = jax.random.split(key)
    # DCGAN discriminator geometry: 64x64 input so the final 4x4 VALID conv
    # reduces to 1x1.  Small batch / small NDF keep everything tiny.
    x = jax.random.normal(xk, (2, 3, 64, 64), jnp.float32)
    params = init_params(key)

    out = jax.block_until_ready(jax.jit(dnet_forward)(params, x))
    assert out.shape == (2,), out.shape

    ref = jax.block_until_ready(dnet_reference(params, x))
    assert jnp.allclose(out, ref, rtol=2e-2, atol=2e-2), (out, ref)

    print("KERNEL_OK")
</pallas_src>

<mosaic_0001>
module attributes {stable_mosaic.version = 11 : i64} {
  func.func @conv_single_kernel(%arg0: i32, %arg1: memref<48x2048xbf16, #tpu.memory_space<vmem>>, %arg2: memref<8x48xbf16, #tpu.memory_space<vmem>>, %arg3: memref<8x1xf32, #tpu.memory_space<vmem>>, %arg4: memref<8x1xf32, #tpu.memory_space<vmem>>, %arg5: memref<8x2048xf32, #tpu.memory_space<vmem>>) attributes {dimension_semantics = [#tpu.dimension_semantics<arbitrary>], iteration_bounds = array<i64: 1>, scalar_prefetch = 0 : i64, scratch_operands = 0 : i64, tpu.core_type = #tpu.core_type<tc>, window_params = [{pipeline_mode = #tpu.pipeline_mode<synchronous>, transform_indices = @transform_0, window_bounds = array<i64: 48, 2048>}, {pipeline_mode = #tpu.pipeline_mode<synchronous>, transform_indices = @transform_1, window_bounds = array<i64: 8, 48>}, {pipeline_mode = #tpu.pipeline_mode<synchronous>, transform_indices = @transform_2, window_bounds = array<i64: 8, 1>}, {pipeline_mode = #tpu.pipeline_mode<synchronous>, transform_indices = @transform_3, window_bounds = array<i64: 8, 1>}, {pipeline_mode = #tpu.pipeline_mode<synchronous>, transform_indices = @transform_4, window_bounds = array<i64: 8, 2048>}]} {
    %c0 = arith.constant 0 : index
    %c0_0 = arith.constant 0 : index
    %0 = vector.load %arg2[%c0, %c0_0] : memref<8x48xbf16, #tpu.memory_space<vmem>>, vector<8x48xbf16>
    %c0_1 = arith.constant 0 : index
    %c0_2 = arith.constant 0 : index
    %1 = vector.load %arg1[%c0_1, %c0_2] : memref<48x2048xbf16, #tpu.memory_space<vmem>>, vector<48x2048xbf16>
    %cst = arith.constant dense<0.000000e+00> : vector<8x2048xf32>
    %2 = tpu.matmul %0, %1, %cst {dimension_numbers = #tpu.dot_dimension_numbers<[1], [0], [0], [1], [0, 0, 1, 1], [], []>} : vector<8x48xbf16>, vector<48x2048xbf16>, vector<8x2048xf32> -> vector<8x2048xf32>
    %cst_3 = arith.constant 2.000000e-01 : f32
    %3 = vector.broadcast %cst_3 : f32 to vector<8x2048xf32>
    %4 = arith.mulf %3, %2 : vector<8x2048xf32>
    %5 = arith.maximumf %2, %4 : vector<8x2048xf32>
    %c0_4 = arith.constant 0 : index
    %c0_5 = arith.constant 0 : index
    %6 = vector.load %arg5[%c0_4, %c0_5] : memref<8x2048xf32, #tpu.memory_space<vmem>>, vector<8x2048xf32>
    tpu.vector_store %arg5[%c0_4, %c0_5], %5 {strides = array<i32>} : memref<8x2048xf32, #tpu.memory_space<vmem>>, vector<8x2048xf32>,
    return
  }
  func.func @transform_0(%arg0: i32) -> (i32, i32) {
    %c0_i32 = arith.constant 0 : i32
    %c0_i32_0 = arith.constant 0 : i32
    %c0_i32_1 = arith.constant 0 : i32
    return %c0_i32, %c0_i32_0 : i32, i32
  }
  func.func @transform_1(%arg0: i32) -> (i32, i32) {
    %c0_i32 = arith.constant 0 : i32
    %c0_i32_0 = arith.constant 0 : i32
    %c0_i32_1 = arith.constant 0 : i32
    return %c0_i32, %c0_i32_0 : i32, i32
  }
  func.func @transform_2(%arg0: i32) -> (i32, i32) {
    %c0_i32 = arith.constant 0 : i32
    %c0_i32_0 = arith.constant 0 : i32
    %c0_i32_1 = arith.constant 0 : i32
    return %c0_i32, %c0_i32_0 : i32, i32
  }
  func.func @transform_3(%arg0: i32) -> (i32, i32) {
    %c0_i32 = arith.constant 0 : i32
    %c0_i32_0 = arith.constant 0 : i32
    %c0_i32_1 = arith.constant 0 : i32
    return %c0_i32, %c0_i32_0 : i32, i32
  }
  func.func @transform_4(%arg0: i32) -> (i32, i32) {
    %c0_i32 = arith.constant 0 : i32
    %c0_i32_0 = arith.constant 0 : i32
    %c0_i32_1 = arith.constant 0 : i32
    return %c0_i32, %c0_i32_0 : i32, i32
  }
}

module attributes {stable_mosaic.version = 11 : i64} {
  func.func @conv_single_kernel(%arg0: i32, %arg1: memref<128x512xbf16, #tpu.memory_space<vmem>>, %arg2: memref<16x128xbf16, #tpu.memory_space<vmem>>, %arg3: memref<16x1xf32, #tpu.memory_space<vmem>>, %arg4: memref<16x1xf32, #tpu.memory_space<vmem>>, %arg5: memref<16x512xf32, #tpu.memory_space<vmem>>) attributes {dimension_semantics = [#tpu.dimension_semantics<arbitrary>], iteration_bounds = array<i64: 1>, scalar_prefetch = 0 : i64, scratch_operands = 0 : i64, tpu.core_type = #tpu.core_type<tc>, window_params = [{pipeline_mode = #tpu.pipeline_mode<synchronous>, transform_indices = @transform_0, window_bounds = array<i64: 128, 512>}, {pipeline_mode = #tpu.pipeline_mode<synchronous>, transform_indices = @transform_1, window_bounds = array<i64: 16, 128>}, {pipeline_mode = #tpu.pipeline_mode<synchronous>, transform_indices = @transform_2, window_bounds = array<i64: 16, 1>}, {pipeline_mode = #tpu.pipeline_mode<synchronous>, transform_indices = @transform_3, window_bounds = array<i64: 16, 1>}, {pipeline_mode = #tpu.pipeline_mode<synchronous>, transform_indices = @transform_4, window_bounds = array<i64: 16, 512>}]} {
    %c0 = arith.constant 0 : index
    %c0_0 = arith.constant 0 : index
    %0 = vector.load %arg2[%c0, %c0_0] : memref<16x128xbf16, #tpu.memory_space<vmem>>, vector<16x128xbf16>
    %c0_1 = arith.constant 0 : index
    %c0_2 = arith.constant 0 : index
    %1 = vector.load %arg1[%c0_1, %c0_2] : memref<128x512xbf16, #tpu.memory_space<vmem>>, vector<128x512xbf16>
    %cst = arith.constant dense<0.000000e+00> : vector<16x512xf32>
    %2 = tpu.matmul %0, %1, %cst {dimension_numbers = #tpu.dot_dimension_numbers<[1], [0], [0], [1], [0, 0, 1, 1], [], []>} : vector<16x128xbf16>, vector<128x512xbf16>, vector<16x512xf32> -> vector<16x512xf32>
    %cst_3 = arith.constant dense<0.000000e+00> : vector<16xf32>
    %3 = vector.multi_reduction <add>, %2, %cst_3 [1] : vector<16x512xf32> to vector<16xf32>
    %4 = vector.shape_cast %3 : vector<16xf32> to vector<16x1xf32>
    %cst_4 = arith.constant 0.001953125 : f32
    %5 = vector.broadcast %cst_4 : f32 to vector<16x1xf32>
    %6 = arith.mulf %4, %5 : vector<16x1xf32>
    %7 = arith.mulf %2, %2 : vector<16x512xf32>
    %cst_5 = arith.constant dense<0.000000e+00> : vector<16xf32>
    %8 = vector.multi_reduction <add>, %7, %cst_5 [1] : vector<16x512xf32> to vector<16xf32>
    %9 = vector.shape_cast %8 : vector<16xf32> to vector<16x1xf32>
    %cst_6 = arith.constant 0.001953125 : f32
    %10 = vector.broadcast %cst_6 : f32 to vector<16x1xf32>
    %11 = arith.mulf %9, %10 : vector<16x1xf32>
    %12 = arith.mulf %6, %6 : vector<16x1xf32>
    %13 = arith.subf %11, %12 : vector<16x1xf32>
    %14 = vector.broadcast %6 : vector<16x1xf32> to vector<16x512xf32>
    %15 = arith.subf %2, %14 : vector<16x512xf32>
    %cst_7 = arith.constant 0.000000e+00 : f32
    %16 = vector.broadcast %cst_7 : f32 to vector<16x1xf32>
    %17 = arith.maximumf %13, %16 : vector<16x1xf32>
    %cst_8 = arith.constant 9.99999974E-6 : f32
    %18 = vector.broadcast %cst_8 : f32 to vector<16x1xf32>
    %19 = arith.addf %17, %18 : vector<16x1xf32>
    %20 = math.rsqrt %19 : vector<16x1xf32>
    %21 = vector.broadcast %20 : vector<16x1xf32> to vector<16x512xf32>
    %22 = arith.mulf %15, %21 : vector<16x512xf32>
    %c0_9 = arith.constant 0 : index
    %c0_10 = arith.constant 0 : index
    %23 = vector.load %arg3[%c0_9, %c0_10] : memref<16x1xf32, #tpu.memory_space<vmem>>, vector<16x1xf32>
    %24 = vector.broadcast %23 : vector<16x1xf32> to vector<16x512xf32>
    %25 = arith.mulf %22, %24 : vector<16x512xf32>
    %c0_11 = arith.constant 0 : index
    %c0_12 = arith.constant 0 : index
    %26 = vector.load %arg4[%c0_11, %c0_12] : memref<16x1xf32, #tpu.memory_space<vmem>>, vector<16x1xf32>
    %27 = vector.broadcast %26 : vector<16x1xf32> to vector<16x512xf32>
    %28 = arith.addf %25, %27 : vector<16x512xf32>
    %cst_13 = arith.constant 2.000000e-01 : f32
    %29 = vector.broadcast %cst_13 : f32 to vector<16x512xf32>
    %30 = arith.mulf %29, %28 : vector<16x512xf32>
    %31 = arith.maximumf %28, %30 : vector<16x512xf32>
    %c0_14 = arith.constant 0 : index
    %c0_15 = arith.constant 0 : index
    %32 = vector.load %arg5[%c0_14, %c0_15] : memref<16x512xf32, #tpu.memory_space<vmem>>, vector<16x512xf32>
    tpu.vector_store %arg5[%c0_14, %c0_15], %31 {strides = array<i32>} : memref<16x512xf32, #tpu.memory_space<vmem>>, vector<16x512xf32>,
    return
  }
  func.func @transform_0(%arg0: i32) -> (i32, i32) {
    %c0_i32 = arith.constant 0 : i32
    %c0_i32_0 = arith.constant 0 : i32
    %c0_i32_1 = arith.constant 0 : i32
    return %c0_i32, %c0_i32_0 : i32, i32
  }
  func.func @transform_1(%arg0: i32) -> (i32, i32) {
    %c0_i32 = arith.constant 0 : i32
    %c0_i32_0 = arith.constant 0 : i32
    %c0_i32_1 = arith.constant 0 : i32
    return %c0_i32, %c0_i32_0 : i32, i32
  }
  func.func @transform_2(%arg0: i32) -> (i32, i32) {
    %c0_i32 = arith.constant 0 : i32
    %c0_i32_0 = arith.constant 0 : i32
    %c0_i32_1 = arith.constant 0 : i32
    return %c0_i32, %c0_i32_0 : i32, i32
  }
  func.func @transform_3(%arg0: i32) -> (i32, i32) {
    %c0_i32 = arith.constant 0 : i32
    %c0_i32_0 = arith.constant 0 : i32
    %c0_i32_1 = arith.constant 0 : i32
    return %c0_i32, %c0_i32_0 : i32, i32
  }
  func.func @transform_4(%arg0: i32) -> (i32, i32) {
    %c0_i32 = arith.constant 0 : i32
    %c0_i32_0 = arith.constant 0 : i32
    %c0_i32_1 = arith.constant 0 : i32
    return %c0_i32, %c0_i32_0 : i32, i32
  }
}

module attributes {stable_mosaic.version = 11 : i64} {
  func.func @conv_single_kernel(%arg0: i32, %arg1: memref<256x128xbf16, #tpu.memory_space<vmem>>, %arg2: memref<32x256xbf16, #tpu.memory_space<vmem>>, %arg3: memref<32x1xf32, #tpu.memory_space<vmem>>, %arg4: memref<32x1xf32, #tpu.memory_space<vmem>>, %arg5: memref<32x128xf32, #tpu.memory_space<vmem>>) attributes {dimension_semantics = [#tpu.dimension_semantics<arbitrary>], iteration_bounds = array<i64: 1>, scalar_prefetch = 0 : i64, scratch_operands = 0 : i64, tpu.core_type = #tpu.core_type<tc>, window_params = [{pipeline_mode = #tpu.pipeline_mode<synchronous>, transform_indices = @transform_0, window_bounds = array<i64: 256, 128>}, {pipeline_mode = #tpu.pipeline_mode<synchronous>, transform_indices = @transform_1, window_bounds = array<i64: 32, 256>}, {pipeline_mode = #tpu.pipeline_mode<synchronous>, transform_indices = @transform_2, window_bounds = array<i64: 32, 1>}, {pipeline_mode = #tpu.pipeline_mode<synchronous>, transform_indices = @transform_3, window_bounds = array<i64: 32, 1>}, {pipeline_mode = #tpu.pipeline_mode<synchronous>, transform_indices = @transform_4, window_bounds = array<i64: 32, 128>}]} {
    %c0 = arith.constant 0 : index
    %c0_0 = arith.constant 0 : index
    %0 = vector.load %arg2[%c0, %c0_0] : memref<32x256xbf16, #tpu.memory_space<vmem>>, vector<32x256xbf16>
    %c0_1 = arith.constant 0 : index
    %c0_2 = arith.constant 0 : index
    %1 = vector.load %arg1[%c0_1, %c0_2] : memref<256x128xbf16, #tpu.memory_space<vmem>>, vector<256x128xbf16>
    %cst = arith.constant dense<0.000000e+00> : vector<32x128xf32>
    %2 = tpu.matmul %0, %1, %cst {dimension_numbers = #tpu.dot_dimension_numbers<[1], [0], [0], [1], [0, 0, 1, 1], [], []>} : vector<32x256xbf16>, vector<256x128xbf16>, vector<32x128xf32> -> vector<32x128xf32>
    %cst_3 = arith.constant dense<0.000000e+00> : vector<32xf32>
    %3 = vector.multi_reduction <add>, %2, %cst_3 [1] : vector<32x128xf32> to vector<32xf32>
    %4 = vector.shape_cast %3 : vector<32xf32> to vector<32x1xf32>
    %cst_4 = arith.constant 7.812500e-03 : f32
    %5 = vector.broadcast %cst_4 : f32 to vector<32x1xf32>
    %6 = arith.mulf %4, %5 : vector<32x1xf32>
    %7 = arith.mulf %2, %2 : vector<32x128xf32>
    %cst_5 = arith.constant dense<0.000000e+00> : vector<32xf32>
    %8 = vector.multi_reduction <add>, %7, %cst_5 [1] : vector<32x128xf32> to vector<32xf32>
    %9 = vector.shape_cast %8 : vector<32xf32> to vector<32x1xf32>
    %cst_6 = arith.constant 7.812500e-03 : f32
    %10 = vector.broadcast %cst_6 : f32 to vector<32x1xf32>
    %11 = arith.mulf %9, %10 : vector<32x1xf32>
    %12 = arith.mulf %6, %6 : vector<32x1xf32>
    %13 = arith.subf %11, %12 : vector<32x1xf32>
    %14 = vector.broadcast %6 : vector<32x1xf32> to vector<32x128xf32>
    %15 = arith.subf %2, %14 : vector<32x128xf32>
    %cst_7 = arith.constant 0.000000e+00 : f32
    %16 = vector.broadcast %cst_7 : f32 to vector<32x1xf32>
    %17 = arith.maximumf %13, %16 : vector<32x1xf32>
    %cst_8 = arith.constant 9.99999974E-6 : f32
    %18 = vector.broadcast %cst_8 : f32 to vector<32x1xf32>
    %19 = arith.addf %17, %18 : vector<32x1xf32>
    %20 = math.rsqrt %19 : vector<32x1xf32>
    %21 = vector.broadcast %20 : vector<32x1xf32> to vector<32x128xf32>
    %22 = arith.mulf %15, %21 : vector<32x128xf32>
    %c0_9 = arith.constant 0 : index
    %c0_10 = arith.constant 0 : index
    %23 = vector.load %arg3[%c0_9, %c0_10] : memref<32x1xf32, #tpu.memory_space<vmem>>, vector<32x1xf32>
    %24 = vector.broadcast %23 : vector<32x1xf32> to vector<32x128xf32>
    %25 = arith.mulf %22, %24 : vector<32x128xf32>
    %c0_11 = arith.constant 0 : index
    %c0_12 = arith.constant 0 : index
    %26 = vector.load %arg4[%c0_11, %c0_12] : memref<32x1xf32, #tpu.memory_space<vmem>>, vector<32x1xf32>
    %27 = vector.broadcast %26 : vector<32x1xf32> to vector<32x128xf32>
    %28 = arith.addf %25, %27 : vector<32x128xf32>
    %cst_13 = arith.constant 2.000000e-01 : f32
    %29 = vector.broadcast %cst_13 : f32 to vector<32x128xf32>
    %30 = arith.mulf %29, %28 : vector<32x128xf32>
    %31 = arith.maximumf %28, %30 : vector<32x128xf32>
    %c0_14 = arith.constant 0 : index
    %c0_15 = arith.constant 0 : index
    %32 = vector.load %arg5[%c0_14, %c0_15] : memref<32x128xf32, #tpu.memory_space<vmem>>, vector<32x128xf32>
    tpu.vector_store %arg5[%c0_14, %c0_15], %31 {strides = array<i32>} : memref<32x128xf32, #tpu.memory_space<vmem>>, vector<32x128xf32>,
    return
  }
  func.func @transform_0(%arg0: i32) -> (i32, i32) {
    %c0_i32 = arith.constant 0 : i32
    %c0_i32_0 = arith.constant 0 : i32
    %c0_i32_1 = arith.constant 0 : i32
    return %c0_i32, %c0_i32_0 : i32, i32
  }
  func.func @transform_1(%arg0: i32) -> (i32, i32) {
    %c0_i32 = arith.constant 0 : i32
    %c0_i32_0 = arith.constant 0 : i32
    %c0_i32_1 = arith.constant 0 : i32
    return %c0_i32, %c0_i32_0 : i32, i32
  }
  func.func @transform_2(%arg0: i32) -> (i32, i32) {
    %c0_i32 = arith.constant 0 : i32
    %c0_i32_0 = arith.constant 0 : i32
    %c0_i32_1 = arith.constant 0 : i32
    return %c0_i32, %c0_i32_0 : i32, i32
  }
  func.func @transform_3(%arg0: i32) -> (i32, i32) {
    %c0_i32 = arith.constant 0 : i32
    %c0_i32_0 = arith.constant 0 : i32
    %c0_i32_1 = arith.constant 0 : i32
    return %c0_i32, %c0_i32_0 : i32, i32
  }
  func.func @transform_4(%arg0: i32) -> (i32, i32) {
    %c0_i32 = arith.constant 0 : i32
    %c0_i32_0 = arith.constant 0 : i32
    %c0_i32_1 = arith.constant 0 : i32
    return %c0_i32, %c0_i32_0 : i32, i32
  }
}

module attributes {stable_mosaic.version = 11 : i64} {
  func.func @tail_kernel(%arg0: i32, %arg1: memref<512x32xbf16, #tpu.memory_space<vmem>>, %arg2: memref<64x512xbf16, #tpu.memory_space<vmem>>, %arg3: memref<64x1xf32, #tpu.memory_space<vmem>>, %arg4: memref<64x1xf32, #tpu.memory_space<vmem>>, %arg5: memref<64x32xf32, #tpu.memory_space<vmem>>, %arg6: memref<32x2xf32, #tpu.memory_space<vmem>>, %arg7: memref<1x2xf32, #tpu.memory_space<vmem>>) attributes {dimension_semantics = [#tpu.dimension_semantics<arbitrary>], iteration_bounds = array<i64: 1>, scalar_prefetch = 0 : i64, scratch_operands = 0 : i64, tpu.core_type = #tpu.core_type<tc>, window_params = [{pipeline_mode = #tpu.pipeline_mode<synchronous>, transform_indices = @transform_0, window_bounds = array<i64: 512, 32>}, {pipeline_mode = #tpu.pipeline_mode<synchronous>, transform_indices = @transform_1, window_bounds = array<i64: 64, 512>}, {pipeline_mode = #tpu.pipeline_mode<synchronous>, transform_indices = @transform_2, window_bounds = array<i64: 64, 1>}, {pipeline_mode = #tpu.pipeline_mode<synchronous>, transform_indices = @transform_3, window_bounds = array<i64: 64, 1>}, {pipeline_mode = #tpu.pipeline_mode<synchronous>, transform_indices = @transform_4, window_bounds = array<i64: 64, 32>}, {pipeline_mode = #tpu.pipeline_mode<synchronous>, transform_indices = @transform_5, window_bounds = array<i64: 32, 2>}, {pipeline_mode = #tpu.pipeline_mode<synchronous>, transform_indices = @transform_6, window_bounds = array<i64: 1, 2>}]} {
    %c0 = arith.constant 0 : index
    %c0_0 = arith.constant 0 : index
    %0 = vector.load %arg2[%c0, %c0_0] : memref<64x512xbf16, #tpu.memory_space<vmem>>, vector<64x512xbf16>
    %c0_1 = arith.constant 0 : index
    %c0_2 = arith.constant 0 : index
    %1 = vector.load %arg1[%c0_1, %c0_2] : memref<512x32xbf16, #tpu.memory_space<vmem>>, vector<512x32xbf16>
    %cst = arith.constant dense<0.000000e+00> : vector<64x32xf32>
    %2 = tpu.matmul %0, %1, %cst {dimension_numbers = #tpu.dot_dimension_numbers<[1], [0], [0], [1], [0, 0, 1, 1], [], []>} : vector<64x512xbf16>, vector<512x32xbf16>, vector<64x32xf32> -> vector<64x32xf32>
    %cst_3 = arith.constant dense<0.000000e+00> : vector<64xf32>
    %3 = vector.multi_reduction <add>, %2, %cst_3 [1] : vector<64x32xf32> to vector<64xf32>
    %4 = vector.shape_cast %3 : vector<64xf32> to vector<64x1xf32>
    %cst_4 = arith.constant 3.125000e-02 : f32
    %5 = vector.broadcast %cst_4 : f32 to vector<64x1xf32>
    %6 = arith.mulf %4, %5 : vector<64x1xf32>
    %7 = arith.mulf %2, %2 : vector<64x32xf32>
    %cst_5 = arith.constant dense<0.000000e+00> : vector<64xf32>
    %8 = vector.multi_reduction <add>, %7, %cst_5 [1] : vector<64x32xf32> to vector<64xf32>
    %9 = vector.shape_cast %8 : vector<64xf32> to vector<64x1xf32>
    %cst_6 = arith.constant 3.125000e-02 : f32
    %10 = vector.broadcast %cst_6 : f32 to vector<64x1xf32>
    %11 = arith.mulf %9, %10 : vector<64x1xf32>
    %12 = arith.mulf %6, %6 : vector<64x1xf32>
    %13 = arith.subf %11, %12 : vector<64x1xf32>
    %14 = vector.broadcast %6 : vector<64x1xf32> to vector<64x32xf32>
    %15 = arith.subf %2, %14 : vector<64x32xf32>
    %cst_7 = arith.constant 0.000000e+00 : f32
    %16 = vector.broadcast %cst_7 : f32 to vector<64x1xf32>
    %17 = arith.maximumf %13, %16 : vector<64x1xf32>
    %cst_8 = arith.constant 9.99999974E-6 : f32
    %18 = vector.broadcast %cst_8 : f32 to vector<64x1xf32>
    %19 = arith.addf %17, %18 : vector<64x1xf32>
    %20 = math.rsqrt %19 : vector<64x1xf32>
    %21 = vector.broadcast %20 : vector<64x1xf32> to vector<64x32xf32>
    %22 = arith.mulf %15, %21 : vector<64x32xf32>
    %c0_9 = arith.constant 0 : index
    %c0_10 = arith.constant 0 : index
    %23 = vector.load %arg3[%c0_9, %c0_10] : memref<64x1xf32, #tpu.memory_space<vmem>>, vector<64x1xf32>
    %24 = vector.broadcast %23 : vector<64x1xf32> to vector<64x32xf32>
    %25 = arith.mulf %22, %24 : vector<64x32xf32>
    %c0_11 = arith.constant 0 : index
    %c0_12 = arith.constant 0 : index
    %26 = vector.load %arg4[%c0_11, %c0_12] : memref<64x1xf32, #tpu.memory_space<vmem>>, vector<64x1xf32>
    %27 = vector.broadcast %26 : vector<64x1xf32> to vector<64x32xf32>
    %28 = arith.addf %25, %27 : vector<64x32xf32>
    %cst_13 = arith.constant 2.000000e-01 : f32
    %29 = vector.broadcast %cst_13 : f32 to vector<64x32xf32>
    %30 = arith.mulf %29, %28 : vector<64x32xf32>
    %31 = arith.maximumf %28, %30 : vector<64x32xf32>
    %c0_14 = arith.constant 0 : index
    %c0_15 = arith.constant 0 : index
    %32 = vector.load %arg5[%c0_14, %c0_15] : memref<64x32xf32, #tpu.memory_space<vmem>>, vector<64x32xf32>
    %33 = arith.mulf %31, %32 : vector<64x32xf32>
    %cst_16 = arith.constant dense<0.000000e+00> : vector<32xf32>
    %34 = vector.multi_reduction <add>, %33, %cst_16 [0] : vector<64x32xf32> to vector<32xf32>
    %35 = vector.shape_cast %34 : vector<32xf32> to vector<1x32xf32>
    %c0_17 = arith.constant 0 : index
    %c0_18 = arith.constant 0 : index
    %36 = vector.load %arg6[%c0_17, %c0_18] : memref<32x2xf32, #tpu.memory_space<vmem>>, vector<32x2xf32>
    %cst_19 = arith.constant dense<0.000000e+00> : vector<1x2xf32>
    %37 = tpu.matmul %35, %36, %cst_19 {dimension_numbers = #tpu.dot_dimension_numbers<[1], [0], [0], [1], [0, 0, 1, 1], [], []>} : vector<1x32xf32>, vector<32x2xf32>, vector<1x2xf32> -> vector<1x2xf32>
    %c0_20 = arith.constant 0 : index
    %c0_21 = arith.constant 0 : index
    %38 = vector.load %arg7[%c0_20, %c0_21] : memref<1x2xf32, #tpu.memory_space<vmem>>, vector<1x2xf32>
    tpu.vector_store %arg7[%c0_20, %c0_21], %37 {strides = array<i32>} : memref<1x2xf32, #tpu.memory_space<vmem>>, vector<1x2xf32>,
    return
  }
  func.func @transform_0(%arg0: i32) -> (i32, i32) {
    %c0_i32 = arith.constant 0 : i32
    %c0_i32_0 = arith.constant 0 : i32
    %c0_i32_1 = arith.constant 0 : i32
    return %c0_i32, %c0_i32_0 : i32, i32
  }
  func.func @transform_1(%arg0: i32) -> (i32, i32) {
    %c0_i32 = arith.constant 0 : i32
    %c0_i32_0 = arith.constant 0 : i32
    %c0_i32_1 = arith.constant 0 : i32
    return %c0_i32, %c0_i32_0 : i32, i32
  }
  func.func @transform_2(%arg0: i32) -> (i32, i32) {
    %c0_i32 = arith.constant 0 : i32
    %c0_i32_0 = arith.constant 0 : i32
    %c0_i32_1 = arith.constant 0 : i32
    return %c0_i32, %c0_i32_0 : i32, i32
  }
  func.func @transform_3(%arg0: i32) -> (i32, i32) {
    %c0_i32 = arith.constant 0 : i32
    %c0_i32_0 = arith.constant 0 : i32
    %c0_i32_1 = arith.constant 0 : i32
    return %c0_i32, %c0_i32_0 : i32, i32
  }
  func.func @transform_4(%arg0: i32) -> (i32, i32) {
    %c0_i32 = arith.constant 0 : i32
    %c0_i32_0 = arith.constant 0 : i32
    %c0_i32_1 = arith.constant 0 : i32
    return %c0_i32, %c0_i32_0 : i32, i32
  }
  func.func @transform_5(%arg0: i32) -> (i32, i32) {
    %c0_i32 = arith.constant 0 : i32
    %c0_i32_0 = arith.constant 0 : i32
    %c0_i32_1 = arith.constant 0 : i32
    return %c0_i32, %c0_i32_0 : i32, i32
  }
  func.func @transform_6(%arg0: i32) -> (i32, i32) {
    %c0_i32 = arith.constant 0 : i32
    %c0_i32_0 = arith.constant 0 : i32
    %c0_i32_1 = arith.constant 0 : i32
    return %c0_i32, %c0_i32_0 : i32, i32
  }
}

</mosaic_0001>

<llo_original>
// kernel: dnet_forward.4
$region0: #{dnet_forward.4}
  #allocation0 [shape = 'u32[]', space=smem, size = 0x4, offset = 0x4, fixed_abs, tag = 'smem constant byte address 0x4 - core index']
  #allocation1 [shape = 'u32[144,128]{1,0:T(1,128)}', space=vmem, size = 0x12000, scoped, tag = 'internal scratch']
  %s0 = inlined_call_operand.vmem [shape: bf16[48,2048], index: 0, kind: input, shape index: {}]
  %s1 = inlined_call_operand.vmem [shape: bf16[8,48], index: 1, kind: input, shape index: {}]
  %s2 = inlined_call_operand.vmem [shape: f32[8,1], index: 2, kind: input, shape index: {}]
  %s3 = inlined_call_operand.vmem [shape: f32[8,1], index: 3, kind: input, shape index: {}]
  %s4 = inlined_call_operand.vmem [shape: f32[8,2048], index: 4, kind: output, shape index: {}]
  %s5 = sld [smem:[#allocation0]]
  $region26: #{dnet_forward.4} parent=0
    _
  %s7 = ssub.s32 1, %s5
  %s8 = scalar_select 0, %s7, %s5
  // Predicated region
  $region2: #{dnet_forward.4} parent=0 // pred_check
    _
  $region3: #{dnet_forward.4} parent=0 // pred_check_branch
    %10 = sbr.rel (0) target = $region5
  $region4: #{dnet_forward.4} parent=0 // pred_region
    _
  $region5: #{dnet_forward.4} parent=0 // pred_fallthru
    _
  // Predicated region
  $region6: #{dnet_forward.4} parent=0 // pred_check
    _
  $region7: #{dnet_forward.4} parent=0 // pred_check_branch
    %12 = sbr.rel (0) target = $region9
  $region8: #{dnet_forward.4} parent=0 // pred_region
    _
  $region9: #{dnet_forward.4} parent=0 // pred_fallthru
    _
  // Predicated region
  $region10: #{dnet_forward.4} parent=0 // pred_check
    _
  $region11: #{dnet_forward.4} parent=0 // pred_check_branch
    %14 = sbr.rel (0) target = $region13
  $region12: #{dnet_forward.4} parent=0 // pred_region
    _
  $region13: #{dnet_forward.4} parent=0 // pred_fallthru
    _
  // Predicated region
  $region14: #{dnet_forward.4} parent=0 // pred_check
    _
  $region15: #{dnet_forward.4} parent=0 // pred_check_branch
    %16 = sbr.rel (0) target = $region17
  $region16: #{dnet_forward.4} parent=0 // pred_region
    _
  $region17: #{dnet_forward.4} parent=0 // pred_fallthru
    _
  %v18 = vld [vmem:[%s1] sm:$0xf]
  %v19 = vld [vmem:[%s0] sm:$0xff]
  %v20 = vld [vmem:[%s0 + $0x8] sm:$0xff]
  %v21 = vld [vmem:[%s0 + $0x10] sm:$0xff]
  %v22 = vld [vmem:[%s0 + $0x18] sm:$0xff]
  %v23 = vld [vmem:[%s0 + $0x20] sm:$0xff]
  %v24 = vld [vmem:[%s0 + $0x28] sm:$0xff]
  %v25 = vld [vmem:[%s0 + $0x30] sm:$0xff]
  %v26 = vld [vmem:[%s0 + $0x38] sm:$0xff]
  %v27 = vld [vmem:[%s0 + $0x40] sm:$0xff]
  %v28 = vld [vmem:[%s0 + $0x48] sm:$0xff]
  %v29 = vld [vmem:[%s0 + $0x50] sm:$0xff]
  %v30 = vld [vmem:[%s0 + $0x58] sm:$0xff]
  %v31 = vld [vmem:[%s0 + $0x60] sm:$0xff]
  %v32 = vld [vmem:[%s0 + $0x68] sm:$0xff]
  %v33 = vld [vmem:[%s0 + $0x70] sm:$0xff]
  %v34 = vld [vmem:[%s0 + $0x78] sm:$0xff]
  %v35 = vld [vmem:[%s0 + $0x80] sm:$0xff]
  %v36 = vld [vmem:[%s0 + $0x88] sm:$0xff]
  %v37 = vld [vmem:[%s0 + $0x90] sm:$0xff]
  %v38 = vld [vmem:[%s0 + $0x98] sm:$0xff]
  %v39 = vld [vmem:[%s0 + $0xa0] sm:$0xff]
  %v40 = vld [vmem:[%s0 + $0xa8] sm:$0xff]
  %v41 = vld [vmem:[%s0 + $0xb0] sm:$0xff]
  %v42 = vld [vmem:[%s0 + $0xb8] sm:$0xff]
  %v43 = vld [vmem:[%s0 + $0xc0] sm:$0xff]
  %v44 = vld [vmem:[%s0 + $0xc8] sm:$0xff]
  %v45 = vld [vmem:[%s0 + $0xd0] sm:$0xff]
  %v46 = vld [vmem:[%s0 + $0xd8] sm:$0xff]
  %v47 = vld [vmem:[%s0 + $0xe0] sm:$0xff]
  %v48 = vld [vmem:[%s0 + $0xe8] sm:$0xff]
  %v49 = vld [vmem:[%s0 + $0xf0] sm:$0xff]
  %v50 = vld [vmem:[%s0 + $0xf8] sm:$0xff]
  %v51 = vld [vmem:[%s0 + $0x100] sm:$0xff]
  %v52 = vld [vmem:[%s0 + $0x108] sm:$0xff]
  %v53 = vld [vmem:[%s0 + $0x110] sm:$0xff]
  %v54 = vld [vmem:[%s0 + $0x118] sm:$0xff]
  %v55 = vld [vmem:[%s0 + $0x120] sm:$0xff]
  %v56 = vld [vmem:[%s0 + $0x128] sm:$0xff]
  %v57 = vld [vmem:[%s0 + $0x130] sm:$0xff]
  %v58 = vld [vmem:[%s0 + $0x138] sm:$0xff]
  %v59 = vld [vmem:[%s0 + $0x140] sm:$0xff]
  %v60 = vld [vmem:[%s0 + $0x148] sm:$0xff]
  %v61 = vld [vmem:[%s0 + $0x150] sm:$0xff]
  %v62 = vld [vmem:[%s0 + $0x158] sm:$0xff]
  %v63 = vld [vmem:[%s0 + $0x160] sm:$0xff]
  %v64 = vld [vmem:[%s0 + $0x168] sm:$0xff]
  %v65 = vld [vmem:[%s0 + $0x170] sm:$0xff]
  %v66 = vld [vmem:[%s0 + $0x178] sm:$0xff]
  %v115 = vunpack.c.l.b16 %v19
  %v116 = vunpack.c.h.b16 %v19
  %v117 = vunpack.c.l.b16 %v20
  %v118 = vunpack.c.h.b16 %v20
  %v119 = vunpack.c.l.b16 %v21
  %v120 = vunpack.c.h.b16 %v21
  %v121 = vunpack.c.l.b16 %v22
  %v122 = vunpack.c.h.b16 %v22
  %v123 = vunpack.c.l.b16 %v23
  %v124 = vunpack.c.h.b16 %v23
  %v125 = vunpack.c.l.b16 %v24
  %v126 = vunpack.c.h.b16 %v24
  %v127 = vunpack.c.l.b16 %v25
  %v128 = vunpack.c.h.b16 %v25
  %v129 = vunpack.c.l.b16 %v26
  %v130 = vunpack.c.h.b16 %v26
  %v131 = vunpack.c.l.b16 %v27
  %v132 = vunpack.c.h.b16 %v27
  %v133 = vunpack.c.l.b16 %v28
  %v134 = vunpack.c.h.b16 %v28
  %v135 = vunpack.c.l.b16 %v29
  %v136 = vunpack.c.h.b16 %v29
  %v137 = vunpack.c.l.b16 %v30
  %v138 = vunpack.c.h.b16 %v30
  %v139 = vunpack.c.l.b16 %v31
  %v140 = vunpack.c.h.b16 %v31
  %v141 = vunpack.c.l.b16 %v32
  %v142 = vunpack.c.h.b16 %v32
  %v143 = vunpack.c.l.b16 %v33
  %v144 = vunpack.c.h.b16 %v33
  %v145 = vunpack.c.l.b16 %v34
  %v146 = vunpack.c.h.b16 %v34
  %v147 = vunpack.c.l.b16 %v35
  %v148 = vunpack.c.h.b16 %v35
  %v149 = vunpack.c.l.b16 %v36
  %v150 = vunpack.c.h.b16 %v36
  %v151 = vunpack.c.l.b16 %v37
  %v152 = vunpack.c.h.b16 %v37
  %v153 = vunpack.c.l.b16 %v38
  %v154 = vunpack.c.h.b16 %v38
  %v155 = vunpack.c.l.b16 %v39
  %v156 = vunpack.c.h.b16 %v39
  %v157 = vunpack.c.l.b16 %v40
  %v158 = vunpack.c.h.b16 %v40
  %v159 = vunpack.c.l.b16 %v41
  %v160 = vunpack.c.h.b16 %v41
  %v161 = vunpack.c.l.b16 %v42
  %v162 = vunpack.c.h.b16 %v42
  %v163 = vunpack.c.l.b16 %v43
  %v164 = vunpack.c.h.b16 %v43
  %v165 = vunpack.c.l.b16 %v44
  %v166 = vunpack.c.h.b16 %v44
  %v167 = vunpack.c.l.b16 %v45
  %v168 = vunpack.c.h.b16 %v45
  %v169 = vunpack.c.l.b16 %v46
  %v170 = vunpack.c.h.b16 %v46
  %v171 = vunpack.c.l.b16 %v47
  %v172 = vunpack.c.h.b16 %v47
  %v173 = vunpack.c.l.b16 %v48
  %v174 = vunpack.c.h.b16 %v48
  %v175 = vunpack.c.l.b16 %v49
  %v176 = vunpack.c.h.b16 %v49
  %v177 = vunpack.c.l.b16 %v50
  %v178 = vunpack.c.h.b16 %v50
  %v179 = vunpack.c.l.b16 %v51
  %v180 = vunpack.c.h.b16 %v51
  %v181 = vunpack.c.l.b16 %v52
  %v182 = vunpack.c.h.b16 %v52
  %v183 = vunpack.c.l.b16 %v53
  %v184 = vunpack.c.h.b16 %v53
  %v185 = vunpack.c.l.b16 %v54
  %v186 = vunpack.c.h.b16 %v54
  %v187 = vunpack.c.l.b16 %v55
  %v188 = vunpack.c.h.b16 %v55
  %v189 = vunpack.c.l.b16 %v56
  %v190 = vunpack.c.h.b16 %v56
  %v191 = vunpack.c.l.b16 %v57
  %v192 = vunpack.c.h.b16 %v57
  %v193 = vunpack.c.l.b16 %v58
  %v194 = vunpack.c.h.b16 %v58
  %v195 = vunpack.c.l.b16 %v59
  %v196 = vunpack.c.h.b16 %v59
  %v197 = vunpack.c.l.b16 %v60
  %v198 = vunpack.c.h.b16 %v60
  %v199 = vunpack.c.l.b16 %v61
  %v200 = vunpack.c.h.b16 %v61
  %v201 = vunpack.c.l.b16 %v62
  %v202 = vunpack.c.h.b16 %v62
  %v203 = vunpack.c.l.b16 %v63
  %v204 = vunpack.c.h.b16 %v63
  %v205 = vunpack.c.l.b16 %v64
  %v206 = vunpack.c.h.b16 %v64
  %v207 = vunpack.c.l.b16 %v65
  %v208 = vunpack.c.h.b16 %v65
  %v209 = vunpack.c.l.b16 %v66
  %v210 = vunpack.c.h.b16 %v66
  %v211 = vpack.c.b16 %v131, %v115
  %v212 = vpack.c.b16 %v132, %v116
  %v213 = vpack.c.b16 %v133, %v117
  %v214 = vpack.c.b16 %v134, %v118
  %v215 = vpack.c.b16 %v135, %v119
  %v216 = vpack.c.b16 %v136, %v120
  %v217 = vpack.c.b16 %v137, %v121
  %v218 = vpack.c.b16 %v138, %v122
  %v219 = vpack.c.b16 %v139, %v123
  %v220 = vpack.c.b16 %v140, %v124
  %v221 = vpack.c.b16 %v141, %v125
  %v222 = vpack.c.b16 %v142, %v126
  %v223 = vpack.c.b16 %v143, %v127
  %v224 = vpack.c.b16 %v144, %v128
  %v225 = vpack.c.b16 %v145, %v129
  %v226 = vpack.c.b16 %v146, %v130
  %v227 = vpack.c.b16 %v163, %v147
  %v228 = vpack.c.b16 %v164, %v148
  %v229 = vpack.c.b16 %v165, %v149
  %v230 = vpack.c.b16 %v166, %v150
  %v231 = vpack.c.b16 %v167, %v151
  %v232 = vpack.c.b16 %v168, %v152
  %v233 = vpack.c.b16 %v169, %v153
  %v234 = vpack.c.b16 %v170, %v154
  %v235 = vpack.c.b16 %v171, %v155
  %v236 = vpack.c.b16 %v172, %v156
  %v237 = vpack.c.b16 %v173, %v157
  %v238 = vpack.c.b16 %v174, %v158
  %v239 = vpack.c.b16 %v175, %v159
  %v240 = vpack.c.b16 %v176, %v160
  %v241 = vpack.c.b16 %v177, %v161
  %v242 = vpack.c.b16 %v178, %v162
  %v243 = vpack.c.b16 %v195, %v179
  %v244 = vpack.c.b16 %v196, %v180
  %v245 = vpack.c.b16 %v197, %v181
  %v246 = vpack.c.b16 %v198, %v182
  %v247 = vpack.c.b16 %v199, %v183
  %v248 = vpack.c.b16 %v200, %v184
  %v249 = vpack.c.b16 %v201, %v185
  %v250 = vpack.c.b16 %v202, %v186
  %v251 = vpack.c.b16 %v203, %v187
  %v252 = vpack.c.b16 %v204, %v188
  %v253 = vpack.c.b16 %v205, %v189
  %v254 = vpack.c.b16 %v206, %v190
  %v255 = vpack.c.b16 %v207, %v191
  %v256 = vpack.c.b16 %v208, %v192
  %v257 = vpack.c.b16 %v209, %v193
  %v258 = vpack.c.b16 %v210, %v194
  %vm307 = vcmask 392192
  %v309 = vsel %vm307, %v18, 0
  %311 = vmatprep.subr.bf16.mxu0 %v212
  %312 = vmatpush1.bf16.msra.mxu0 %v211
  %313 = vmatprep.subr.bf16.mxu0 %v228
  %314 = vmatpush1.bf16.msra.mxu0 %v227
  %315 = vmatprep.subr.bf16.mxu0 %v244
  %316 = vmatpush1.bf16.msra.mxu0 %v243
  %317 = vmatprep.subr.bf16.mxu0 0
  %318 = vmatpush1.bf16.msra.mxu0 0
  %319 = vmatprep.subr.bf16.mxu0 0
  %320 = vmatpush1.bf16.msra.mxu0 0
  %321 = vmatprep.subr.bf16.mxu0 0
  %322 = vmatpush1.bf16.msra.mxu0 0
  %323 = vmatprep.subr.bf16.mxu0 0
  %324 = vmatpush1.bf16.msra.mxu0 0
  %325 = vmatprep.subr.bf16.mxu0 0
  %326 = vmatpush1.bf16.msra.mxu0 0
  %327 = vmatprep.subr.bf16.mxu0 0
  %328 = vmatpush1.bf16.msra.mxu0 0
  %329 = vmatprep.subr.bf16.mxu0 0
  %330 = vmatpush1.bf16.msra.mxu0 0
  %331 = vmatprep.subr.bf16.mxu0 0
  %332 = vmatpush1.bf16.msra.mxu0 0
  %333 = vmatprep.subr.bf16.mxu0 0
  %334 = vmatpush1.bf16.msra.mxu0 0
  %335 = vmatprep.subr.bf16.mxu0 0
  %336 = vmatpush1.bf16.msra.mxu0 0
  %337 = vmatprep.subr.bf16.mxu0 0
  %338 = vmatpush1.bf16.msra.mxu0 0
  %339 = vmatprep.subr.bf16.mxu0 0
  %340 = vmatpush1.bf16.msra.mxu0 0
  %341 = vmatprep.subr.bf16.mxu0 0
  %342 = vmatpush1.bf16.msra.mxu0 0
  %343 = vmatprep.mubr.bf16.mxu0 0
  %344 = vmatmul.mubr.bf16.gmra.mrb[0].mxu0 %v309
  %v345 = vpop.f32.mrb[0].mxu0
  %v346 = vadd.f32 0.0, %v345
  %v347 = vpop.f32.mrb[0].mxu0
  %v348 = vadd.f32 0.0, %v347
  %v349 = vpop.f32.mrb[0].mxu0
  %v350 = vpop.f32.mrb[0].mxu0
  %351 = vdwg.mxu0
  %352 = vmatprep.subr.bf16.mxu0 %v214
  %353 = vmatpush1.bf16.msra.mxu0 %v213
  %354 = vmatprep.subr.bf16.mxu0 %v230
  %355 = vmatpush1.bf16.msra.mxu0 %v229
  %356 = vmatprep.subr.bf16.mxu0 %v246
  %357 = vmatpush1.bf16.msra.mxu0 %v245
  %358 = vmatprep.subr.bf16.mxu0 0
  %359 = vmatpush1.bf16.msra.mxu0 0
  %360 = vmatprep.subr.bf16.mxu0 0
  %361 = vmatpush1.bf16.msra.mxu0 0
  %362 = vmatprep.subr.bf16.mxu0 0
  %363 = vmatpush1.bf16.msra.mxu0 0
  %364 = vmatprep.subr.bf16.mxu0 0
  %365 = vmatpush1.bf16.msra.mxu0 0
  %366 = vmatprep.subr.bf16.mxu0 0
  %367 = vmatpush1.bf16.msra.mxu0 0
  %368 = vmatprep.subr.bf16.mxu0 0
  %369 = vmatpush1.bf16.msra.mxu0 0
  %370 = vmatprep.subr.bf16.mxu0 0
  %371 = vmatpush1.bf16.msra.mxu0 0
  %372 = vmatprep.subr.bf16.mxu0 0
  %373 = vmatpush1.bf16.msra.mxu0 0
  %374 = vmatprep.subr.bf16.mxu0 0
  %375 = vmatpush1.bf16.msra.mxu0 0
  %376 = vmatprep.subr.bf16.mxu0 0
  %377 = vmatpush1.bf16.msra.mxu0 0
  %378 = vmatprep.subr.bf16.mxu0 0
  %379 = vmatpush1.bf16.msra.mxu0 0
  %380 = vmatprep.subr.bf16.mxu0 0
  %381 = vmatpush1.bf16.msra.mxu0 0
  %382 = vmatprep.subr.bf16.mxu0 0
  %383 = vmatpush1.bf16.msra.mxu0 0
  %384 = vmatprep.mubr.bf16.mxu0 0
  %385 = vmatmul.mubr.bf16.gmra.mrb[0].mxu0 %v309
  %v386 = vpop.f32.mrb[0].mxu0
  %v387 = vadd.f32 0.0, %v386
  %v388 = vpop.f32.mrb[0].mxu0
  %v389 = vadd.f32 0.0, %v388
  %v390 = vpop.f32.mrb[0].mxu0
  %v391 = vpop.f32.mrb[0].mxu0
  %392 = vdwg.mxu0
  %393 = vmatprep.subr.bf16.mxu0 %v216
  %394 = vmatpush1.bf16.msra.mxu0 %v215
  %395 = vmatprep.subr.bf16.mxu0 %v232
  %396 = vmatpush1.bf16.msra.mxu0 %v231
  %397 = vmatprep.subr.bf16.mxu0 %v248
  %398 = vmatpush1.bf16.msra.mxu0 %v247
  %399 = vmatprep.subr.bf16.mxu0 0
  %400 = vmatpush1.bf16.msra.mxu0 0
  %401 = vmatprep.subr.bf16.mxu0 0
  %402 = vmatpush1.bf16.msra.mxu0 0
  %403 = vmatprep.subr.bf16.mxu0 0
  %404 = vmatpush1.bf16.msra.mxu0 0
  %405 = vmatprep.subr.bf16.mxu0 0
  %406 = vmatpush1.bf16.msra.mxu0 0
  %407 = vmatprep.subr.bf16.mxu0 0
  %408 = vmatpush1.bf16.msra.mxu0 0
  %409 = vmatprep.subr.bf16.mxu0 0
  %410 = vmatpush1.bf16.msra.mxu0 0
  %411 = vmatprep.subr.bf16.mxu0 0
  %412 = vmatpush1.bf16.msra.mxu0 0
  %413 = vmatprep.subr.bf16.mxu0 0
  %414 = vmatpush1.bf16.msra.mxu0 0
  %415 = vmatprep.subr.bf16.mxu0 0
  %416 = vmatpush1.bf16.msra.mxu0 0
  %417 = vmatprep.subr.bf16.mxu0 0
  %418 = vmatpush1.bf16.msra.mxu0 0
  %419 = vmatprep.subr.bf16.mxu0 0
  %420 = vmatpush1.bf16.msra.mxu0 0
  %421 = vmatprep.subr.bf16.mxu0 0
  %422 = vmatpush1.bf16.msra.mxu0 0
  %423 = vmatprep.subr.bf16.mxu0 0
  %424 = vmatpush1.bf16.msra.mxu0 0
  %425 = vmatprep.mubr.bf16.mxu0 0
  %426 = vmatmul.mubr.bf16.gmra.mrb[0].mxu0 %v309
  %v427 = vpop.f32.mrb[0].mxu0
  %v428 = vadd.f32 0.0, %v427
  %v429 = vpop.f32.mrb[0].mxu0
  %v430 = vadd.f32 0.0, %v429
  %v431 = vpop.f32.mrb[0].mxu0
  %v432 = vpop.f32.mrb[0].mxu0
  %433 = vdwg.mxu0
  %434 = vmatprep.subr.bf16.mxu0 %v218
  %435 = vmatpush1.bf16.msra.mxu0 %v217
  %436 = vmatprep.subr.bf16.mxu0 %v234
  %437 = vmatpush1.bf16.msra.mxu0 %v233
  %438 = vmatprep.subr.bf16.mxu0 %v250
  %439 = vmatpush1.bf16.msra.mxu0 %v249
  %440 = vmatprep.subr.bf16.mxu0 0
  %441 = vmatpush1.bf16.msra.mxu0 0
  %442 = vmatprep.subr.bf16.mxu0 0
  %443 = vmatpush1.bf16.msra.mxu0 0
  %444 = vmatprep.subr.bf16.mxu0 0
  %445 = vmatpush1.bf16.msra.mxu0 0
  %446 = vmatprep.subr.bf16.mxu0 0
  %447 = vmatpush1.bf16.msra.mxu0 0
  %448 = vmatprep.subr.bf16.mxu0 0
  %449 = vmatpush1.bf16.msra.mxu0 0
  %450 = vmatprep.subr.bf16.mxu0 0
  %451 = vmatpush1.bf16.msra.mxu0 0
  %452 = vmatprep.subr.bf16.mxu0 0
  %453 = vmatpush1.bf16.msra.mxu0 0
  %454 = vmatprep.subr.bf16.mxu0 0
  %455 = vmatpush1.bf16.msra.mxu0 0
  %456 = vmatprep.subr.bf16.mxu0 0
  %457 = vmatpush1.bf16.msra.mxu0 0
  %458 = vmatprep.subr.bf16.mxu0 0
  %459 = vmatpush1.bf16.msra.mxu0 0
  %460 = vmatprep.subr.bf16.mxu0 0
  %461 = vmatpush1.bf16.msra.mxu0 0
  %462 = vmatprep.subr.bf16.mxu0 0
  %463 = vmatpush1.bf16.msra.mxu0 0
  %464 = vmatprep.subr.bf16.mxu0 0
  %465 = vmatpush1.bf16.msra.mxu0 0
  %466 = vmatprep.mubr.bf16.mxu0 0
  %467 = vmatmul.mubr.bf16.gmra.mrb[0].mxu0 %v309
  %v468 = vpop.f32.mrb[0].mxu0
  %v469 = vadd.f32 0.0, %v468
  %v470 = vpop.f32.mrb[0].mxu0
  %v471 = vadd.f32 0.0, %v470
  %v472 = vpop.f32.mrb[0].mxu0
  %v473 = vpop.f32.mrb[0].mxu0
  %474 = vdwg.mxu0
  %475 = vmatprep.subr.bf16.mxu0 %v220
  %476 = vmatpush1.bf16.msra.mxu0 %v219
  %477 = vmatprep.subr.bf16.mxu0 %v236
  %478 = vmatpush1.bf16.msra.mxu0 %v235
  %479 = vmatprep.subr.bf16.mxu0 %v252
  %480 = vmatpush1.bf16.msra.mxu0 %v251
  %481 = vmatprep.subr.bf16.mxu0 0
  %482 = vmatpush1.bf16.msra.mxu0 0
  %483 = vmatprep.subr.bf16.mxu0 0
  %484 = vmatpush1.bf16.msra.mxu0 0
  %485 = vmatprep.subr.bf16.mxu0 0
  %486 = vmatpush1.bf16.msra.mxu0 0
  %487 = vmatprep.subr.bf16.mxu0 0
  %488 = vmatpush1.bf16.msra.mxu0 0
  %489 = vmatprep.subr.bf16.mxu0 0
  %490 = vmatpush1.bf16.msra.mxu0 0
  %491 = vmatprep.subr.bf16.mxu0 0
  %492 = vmatpush1.bf16.msra.mxu0 0
  %493 = vmatprep.subr.bf16.mxu0 0
  %494 = vmatpush1.bf16.msra.mxu0 0
  %495 = vmatprep.subr.bf16.mxu0 0
  %496 = vmatpush1.bf16.msra.mxu0 0
  %497 = vmatprep.subr.bf16.mxu0 0
  %498 = vmatpush1.bf16.msra.mxu0 0
  %499 = vmatprep.subr.bf16.mxu0 0
  %500 = vmatpush1.bf16.msra.mxu0 0
  %501 = vmatprep.subr.bf16.mxu0 0
  %502 = vmatpush1.bf16.msra.mxu0 0
  %503 = vmatprep.subr.bf16.mxu0 0
  %504 = vmatpush1.bf16.msra.mxu0 0
  %505 = vmatprep.subr.bf16.mxu0 0
  %506 = vmatpush1.bf16.msra.mxu0 0
  %507 = vmatprep.mubr.bf16.mxu0 0
  %508 = vmatmul.mubr.bf16.gmra.mrb[0].mxu0 %v309
  %v509 = vpop.f32.mrb[0].mxu0
  %v510 = vadd.f32 0.0, %v509
  %v511 = vpop.f32.mrb[0].mxu0
  %v512 = vadd.f32 0.0, %v511
  %v513 = vpop.f32.mrb[0].mxu0
  %v514 = vpop.f32.mrb[0].mxu0
  %515 = vdwg.mxu0
  %516 = vmatprep.subr.bf16.mxu0 %v222
  %517 = vmatpush1.bf16.msra.mxu0 %v221
  %518 = vmatprep.subr.bf16.mxu0 %v238
  %519 = vmatpush1.bf16.msra.mxu0 %v237
  %520 = vmatprep.subr.bf16.mxu0 %v254
  %521 = vmatpush1.bf16.msra.mxu0 %v253
  %522 = vmatprep.subr.bf16.mxu0 0
  %523 = vmatpush1.bf16.msra.mxu0 0
  %524 = vmatprep.subr.bf16.mxu0 0
  %525 = vmatpush1.bf16.msra.mxu0 0
  %526 = vmatprep.subr.bf16.mxu0 0
  %527 = vmatpush1.bf16.msra.mxu0 0
  %528 = vmatprep.subr.bf16.mxu0 0
  %529 = vmatpush1.bf16.msra.mxu0 0
  %530 = vmatprep.subr.bf16.mxu0 0
  %531 = vmatpush1.bf16.msra.mxu0 0
  %532 = vmatprep.subr.bf16.mxu0 0
  %533 = vmatpush1.bf16.msra.mxu0 0
  %534 = vmatprep.subr.bf16.mxu0 0
  %535 = vmatpush1.bf16.msra.mxu0 0
  %536 = vmatprep.subr.bf16.mxu0 0
  %537 = vmatpush1.bf16.msra.mxu0 0
  %538 = vmatprep.subr.bf16.mxu0 0
  %539 = vmatpush1.bf16.msra.mxu0 0
  %540 = vmatprep.subr.bf16.mxu0 0
  %541 = vmatpush1.bf16.msra.mxu0 0
  %542 = vmatprep.subr.bf16.mxu0 0
  %543 = vmatpush1.bf16.msra.mxu0 0
  %544 = vmatprep.subr.bf16.mxu0 0
  %545 = vmatpush1.bf16.msra.mxu0 0
  %546 = vmatprep.subr.bf16.mxu0 0
  %547 = vmatpush1.bf16.msra.mxu0 0
  %548 = vmatprep.mubr.bf16.mxu0 0
  %549 = vmatmul.mubr.bf16.gmra.mrb[0].mxu0 %v309
  %v550 = vpop.f32.mrb[0].mxu0
  %v551 = vadd.f32 0.0, %v550
  %v552 = vpop.f32.mrb[0].mxu0
  %v553 = vadd.f32 0.0, %v552
  %v554 = vpop.f32.mrb[0].mxu0
  %v555 = vpop.f32.mrb[0].mxu0
  %556 = vdwg.mxu0
  %557 = vmatprep.subr.bf16.mxu0 %v224
  %558 = vmatpush1.bf16.msra.mxu0 %v223
  %559 = vmatprep.subr.bf16.mxu0 %v240
  %560 = vmatpush1.bf16.msra.mxu0 %v239
  %561 = vmatprep.subr.bf16.mxu0 %v256
  %562 = vmatpush1.bf16.msra.mxu0 %v255
  %563 = vmatprep.subr.bf16.mxu0 0
  %564 = vmatpush1.bf16.msra.mxu0 0
  %565 = vmatprep.subr.bf16.mxu0 0
  %566 = vmatpush1.bf16.msra.mxu0 0
  %567 = vmatprep.subr.bf16.mxu0 0
  %568 = vmatpush1.bf16.msra.mxu0 0
  %569 = vmatprep.subr.bf16.mxu0 0
  %570 = vmatpush1.bf16.msra.mxu0 0
  %571 = vmatprep.subr.bf16.mxu0 0
  %572 = vmatpush1.bf16.msra.mxu0 0
  %573 = vmatprep.subr.bf16.mxu0 0
  %574 = vmatpush1.bf16.msra.mxu0 0
  %575 = vmatprep.subr.bf16.mxu0 0
  %576 = vmatpush1.bf16.msra.mxu0 0
  %577 = vmatprep.subr.bf16.mxu0 0
  %578 = vmatpush1.bf16.msra.mxu0 0
  %579 = vmatprep.subr.bf16.mxu0 0
  %580 = vmatpush1.bf16.msra.mxu0 0
  %581 = vmatprep.subr.bf16.mxu0 0
  %582 = vmatpush1.bf16.msra.mxu0 0
  %583 = vmatprep.subr.bf16.mxu0 0
  %584 = vmatpush1.bf16.msra.mxu0 0
  %585 = vmatprep.subr.bf16.mxu0 0
  %586 = vmatpush1.bf16.msra.mxu0 0
  %587 = vmatprep.subr.bf16.mxu0 0
  %588 = vmatpush1.bf16.msra.mxu0 0
  %589 = vmatprep.mubr.bf16.mxu0 0
  %590 = vmatmul.mubr.bf16.gmra.mrb[0].mxu0 %v309
  %v591 = vpop.f32.mrb[0].mxu0
  %v592 = vadd.f32 0.0, %v591
  %v593 = vpop.f32.mrb[0].mxu0
  %v594 = vadd.f32 0.0, %v593
  %v595 = vpop.f32.mrb[0].mxu0
  %v596 = vpop.f32.mrb[0].mxu0
  %597 = vdwg.mxu0
  %598 = vmatprep.subr.bf16.mxu0 %v226
  %599 = vmatpush1.bf16.msra.mxu0 %v225
  %600 = vmatprep.subr.bf16.mxu0 %v242
  %601 = vmatpush1.bf16.msra.mxu0 %v241
  %602 = vmatprep.subr.bf16.mxu0 %v258
  %603 = vmatpush1.bf16.msra.mxu0 %v257
  %604 = vmatprep.subr.bf16.mxu0 0
  %605 = vmatpush1.bf16.msra.mxu0 0
  %606 = vmatprep.subr.bf16.mxu0 0
  %607 = vmatpush1.bf16.msra.mxu0 0
  %608 = vmatprep.subr.bf16.mxu0 0
  %609 = vmatpush1.bf16.msra.mxu0 0
  %610 = vmatprep.subr.bf16.mxu0 0
  %611 = vmatpush1.bf16.msra.mxu0 0
  %612 = vmatprep.subr.bf16.mxu0 0
  %613 = vmatpush1.bf16.msra.mxu0 0
  %614 = vmatprep.subr.bf16.mxu0 0
  %615 = vmatpush1.bf16.msra.mxu0 0
  %616 = vmatprep.subr.bf16.mxu0 0
  %617 = vmatpush1.bf16.msra.mxu0 0
  %618 = vmatprep.subr.bf16.mxu0 0
  %619 = vmatpush1.bf16.msra.mxu0 0
  %620 = vmatprep.subr.bf16.mxu0 0
  %621 = vmatpush1.bf16.msra.mxu0 0
  %622 = vmatprep.subr.bf16.mxu0 0
  %623 = vmatpush1.bf16.msra.mxu0 0
  %624 = vmatprep.subr.bf16.mxu0 0
  %625 = vmatpush1.bf16.msra.mxu0 0
  %626 = vmatprep.subr.bf16.mxu0 0
  %627 = vmatpush1.bf16.msra.mxu0 0
  %628 = vmatprep.subr.bf16.mxu0 0
  %629 = vmatpush1.bf16.msra.mxu0 0
  %630 = vmatprep.mubr.bf16.mxu0 0
  %631 = vmatmul.mubr.bf16.gmra.mrb[0].mxu0 %v309
  %v632 = vpop.f32.mrb[0].mxu0
  %v633 = vadd.f32 0.0, %v632
  %v634 = vpop.f32.mrb[0].mxu0
  %v635 = vadd.f32 0.0, %v634
  %v636 = vpop.f32.mrb[0].mxu0
  %v637 = vpop.f32.mrb[0].mxu0
  %638 = vdwg.mxu0
  %v639 = vmul.f32 %v346, 0.2
  %v640 = vmul.f32 %v348, 0.2
  %v641 = vmul.f32 %v387, 0.2
  %v642 = vmul.f32 %v389, 0.2
  %v643 = vmul.f32 %v428, 0.2
  %v644 = vmul.f32 %v430, 0.2
  %v645 = vmul.f32 %v469, 0.2
  %v646 = vmul.f32 %v471, 0.2
  %v647 = vmul.f32 %v510, 0.2
  %v648 = vmul.f32 %v512, 0.2
  %v649 = vmul.f32 %v551, 0.2
  %v650 = vmul.f32 %v553, 0.2
  %v651 = vmul.f32 %v592, 0.2
  %v652 = vmul.f32 %v594, 0.2
  %v653 = vmul.f32 %v633, 0.2
  %v654 = vmul.f32 %v635, 0.2
  %v655 = vmax.f32 %v346, %v639
  %v656 = vmax.f32 %v348, %v640
  %v657 = vmax.f32 %v387, %v641
  %v658 = vmax.f32 %v389, %v642
  %v659 = vmax.f32 %v428, %v643
  %v660 = vmax.f32 %v430, %v644
  %v661 = vmax.f32 %v469, %v645
  %v662 = vmax.f32 %v471, %v646
  %v663 = vmax.f32 %v510, %v647
  %v664 = vmax.f32 %v512, %v648
  %v665 = vmax.f32 %v551, %v649
  %v666 = vmax.f32 %v553, %v650
  %v667 = vmax.f32 %v592, %v651
  %v668 = vmax.f32 %v594, %v652
  %v669 = vmax.f32 %v633, %v653
  %v670 = vmax.f32 %v635, %v654
  %671 = vst [vmem:[%s4] sm:$0xff] %v655
  %672 = vst [vmem:[%s4 + $0x8] sm:$0xff] %v656
  %673 = vst [vmem:[%s4 + $0x10] sm:$0xff] %v657
  %674 = vst [vmem:[%s4 + $0x18] sm:$0xff] %v658
  %675 = vst [vmem:[%s4 + $0x20] sm:$0xff] %v659
  %676 = vst [vmem:[%s4 + $0x28] sm:$0xff] %v660
  %677 = vst [vmem:[%s4 + $0x30] sm:$0xff] %v661
  %678 = vst [vmem:[%s4 + $0x38] sm:$0xff] %v662
  %679 = vst [vmem:[%s4 + $0x40] sm:$0xff] %v663
  %680 = vst [vmem:[%s4 + $0x48] sm:$0xff] %v664
  %681 = vst [vmem:[%s4 + $0x50] sm:$0xff] %v665
  %682 = vst [vmem:[%s4 + $0x58] sm:$0xff] %v666
  %683 = vst [vmem:[%s4 + $0x60] sm:$0xff] %v667
  %684 = vst [vmem:[%s4 + $0x68] sm:$0xff] %v668
  %685 = vst [vmem:[%s4 + $0x70] sm:$0xff] %v669
  %686 = vst [vmem:[%s4 + $0x78] sm:$0xff] %v670
  // Predicated region
  $region18: #{dnet_forward.4} parent=0 // pred_check
    _
  $region19: #{dnet_forward.4} parent=0 // pred_check_branch
    %688 = sbr.rel (0) target = $region21
  $region20: #{dnet_forward.4} parent=0 // pred_region
    _
  $region21: #{dnet_forward.4} parent=0 // pred_fallthru
    _
  // Predicated region
  $region22: #{dnet_forward.4} parent=0 // pred_check
    _
  $region23: #{dnet_forward.4} parent=0 // pred_check_branch
    %690 = sbr.rel (0) target = $region25
  $region24: #{dnet_forward.4} parent=0 // pred_region
    _
  $region25: #{dnet_forward.4} parent=0 // pred_fallthru
    _

// kernel: dnet_forward.5
$region0: #{dnet_forward.5}
  #allocation0 [shape = 'u32[]', space=smem, size = 0x4, offset = 0x4, fixed_abs, tag = 'smem constant byte address 0x4 - core index']
  #allocation1 [shape = 'u32[144,128]{1,0:T(1,128)}', space=vmem, size = 0x12000, scoped, tag = 'internal scratch']
  %s0 = inlined_call_operand.vmem [shape: bf16[128,512], index: 0, kind: input, shape index: {}]
  %s1 = inlined_call_operand.vmem [shape: bf16[16,128], index: 1, kind: input, shape index: {}]
  %s2 = inlined_call_operand.vmem [shape: f32[16,1], index: 2, kind: input, shape index: {}]
  %s3 = inlined_call_operand.vmem [shape: f32[16,1], index: 3, kind: input, shape index: {}]
  %s4 = inlined_call_operand.vmem [shape: f32[16,512], index: 4, kind: output, shape index: {}]
  %s5 = sld [smem:[#allocation0]]
  $region26: #{dnet_forward.5} parent=0
    _
  %s7 = ssub.s32 1, %s5
  %s8 = scalar_select 0, %s7, %s5
  // Predicated region
  $region2: #{dnet_forward.5} parent=0 // pred_check
    _
  $region3: #{dnet_forward.5} parent=0 // pred_check_branch
    %10 = sbr.rel (0) target = $region5
  $region4: #{dnet_forward.5} parent=0 // pred_region
    _
  $region5: #{dnet_forward.5} parent=0 // pred_fallthru
    _
  // Predicated region
  $region6: #{dnet_forward.5} parent=0 // pred_check
    _
  $region7: #{dnet_forward.5} parent=0 // pred_check_branch
    %12 = sbr.rel (0) target = $region9
  $region8: #{dnet_forward.5} parent=0 // pred_region
    _
  $region9: #{dnet_forward.5} parent=0 // pred_fallthru
    _
  // Predicated region
  $region10: #{dnet_forward.5} parent=0 // pred_check
    _
  $region11: #{dnet_forward.5} parent=0 // pred_check_branch
    %14 = sbr.rel (0) target = $region13
  $region12: #{dnet_forward.5} parent=0 // pred_region
    _
  $region13: #{dnet_forward.5} parent=0 // pred_fallthru
    _
  // Predicated region
  $region14: #{dnet_forward.5} parent=0 // pred_check
    _
  $region15: #{dnet_forward.5} parent=0 // pred_check_branch
    %16 = sbr.rel (0) target = $region17
  $region16: #{dnet_forward.5} parent=0 // pred_region
    _
  $region17: #{dnet_forward.5} parent=0 // pred_fallthru
    _
  %v18 = vld [vmem:[%s1] sm:$0xf]
  %v19 = vld [vmem:[%s1 + $0x4] sm:$0xf]
  %v20 = vld [vmem:[%s0] sm:$0xff]
  %v21 = vld [vmem:[%s0 + $0x8] sm:$0xff]
  %v22 = vld [vmem:[%s0 + $0x10] sm:$0xff]
  %v23 = vld [vmem:[%s0 + $0x18] sm:$0xff]
  %v24 = vld [vmem:[%s0 + $0x20] sm:$0xff]
  %v25 = vld [vmem:[%s0 + $0x28] sm:$0xff]
  %v26 = vld [vmem:[%s0 + $0x30] sm:$0xff]
  %v27 = vld [vmem:[%s0 + $0x38] sm:$0xff]
  %v28 = vld [vmem:[%s0 + $0x40] sm:$0xff]
  %v29 = vld [vmem:[%s0 + $0x48] sm:$0xff]
  %v30 = vld [vmem:[%s0 + $0x50] sm:$0xff]
  %v31 = vld [vmem:[%s0 + $0x58] sm:$0xff]
  %v32 = vld [vmem:[%s0 + $0x60] sm:$0xff]
  %v33 = vld [vmem:[%s0 + $0x68] sm:$0xff]
  %v34 = vld [vmem:[%s0 + $0x70] sm:$0xff]
  %v35 = vld [vmem:[%s0 + $0x78] sm:$0xff]
  %v36 = vld [vmem:[%s0 + $0x80] sm:$0xff]
  %v37 = vld [vmem:[%s0 + $0x88] sm:$0xff]
  %v38 = vld [vmem:[%s0 + $0x90] sm:$0xff]
  %v39 = vld [vmem:[%s0 + $0x98] sm:$0xff]
  %v40 = vld [vmem:[%s0 + $0xa0] sm:$0xff]
  %v41 = vld [vmem:[%s0 + $0xa8] sm:$0xff]
  %v42 = vld [vmem:[%s0 + $0xb0] sm:$0xff]
  %v43 = vld [vmem:[%s0 + $0xb8] sm:$0xff]
  %v44 = vld [vmem:[%s0 + $0xc0] sm:$0xff]
  %v45 = vld [vmem:[%s0 + $0xc8] sm:$0xff]
  %v46 = vld [vmem:[%s0 + $0xd0] sm:$0xff]
  %v47 = vld [vmem:[%s0 + $0xd8] sm:$0xff]
  %v48 = vld [vmem:[%s0 + $0xe0] sm:$0xff]
  %v49 = vld [vmem:[%s0 + $0xe8] sm:$0xff]
  %v50 = vld [vmem:[%s0 + $0xf0] sm:$0xff]
  %v51 = vld [vmem:[%s0 + $0xf8] sm:$0xff]
  %v54 = vunpack.c.l.b16 %v18
  %v55 = vunpack.c.l.b16 %v19
  %v56 = vpack.c.b16 %v55, %v54
  %v90 = vunpack.c.l.b16 %v20
  %v91 = vunpack.c.h.b16 %v20
  %v92 = vunpack.c.l.b16 %v21
  %v93 = vunpack.c.h.b16 %v21
  %v94 = vunpack.c.l.b16 %v22
  %v95 = vunpack.c.h.b16 %v22
  %v96 = vunpack.c.l.b16 %v23
  %v97 = vunpack.c.h.b16 %v23
  %v98 = vunpack.c.l.b16 %v24
  %v99 = vunpack.c.h.b16 %v24
  %v100 = vunpack.c.l.b16 %v25
  %v101 = vunpack.c.h.b16 %v25
  %v102 = vunpack.c.l.b16 %v26
  %v103 = vunpack.c.h.b16 %v26
  %v104 = vunpack.c.l.b16 %v27
  %v105 = vunpack.c.h.b16 %v27
  %v106 = vunpack.c.l.b16 %v28
  %v107 = vunpack.c.h.b16 %v28
  %v108 = vunpack.c.l.b16 %v29
  %v109 = vunpack.c.h.b16 %v29
  %v110 = vunpack.c.l.b16 %v30
  %v111 = vunpack.c.h.b16 %v30
  %v112 = vunpack.c.l.b16 %v31
  %v113 = vunpack.c.h.b16 %v31
  %v114 = vunpack.c.l.b16 %v32
  %v115 = vunpack.c.h.b16 %v32
  %v116 = vunpack.c.l.b16 %v33
  %v117 = vunpack.c.h.b16 %v33
  %v118 = vunpack.c.l.b16 %v34
  %v119 = vunpack.c.h.b16 %v34
  %v120 = vunpack.c.l.b16 %v35
  %v121 = vunpack.c.h.b16 %v35
  %v122 = vunpack.c.l.b16 %v36
  %v123 = vunpack.c.h.b16 %v36
  %v124 = vunpack.c.l.b16 %v37
  %v125 = vunpack.c.h.b16 %v37
  %v126 = vunpack.c.l.b16 %v38
  %v127 = vunpack.c.h.b16 %v38
  %v128 = vunpack.c.l.b16 %v39
  %v129 = vunpack.c.h.b16 %v39
  %v130 = vunpack.c.l.b16 %v40
  %v131 = vunpack.c.h.b16 %v40
  %v132 = vunpack.c.l.b16 %v41
  %v133 = vunpack.c.h.b16 %v41
  %v134 = vunpack.c.l.b16 %v42
  %v135 = vunpack.c.h.b16 %v42
  %v136 = vunpack.c.l.b16 %v43
  %v137 = vunpack.c.h.b16 %v43
  %v138 = vunpack.c.l.b16 %v44
  %v139 = vunpack.c.h.b16 %v44
  %v140 = vunpack.c.l.b16 %v45
  %v141 = vunpack.c.h.b16 %v45
  %v142 = vunpack.c.l.b16 %v46
  %v143 = vunpack.c.h.b16 %v46
  %v144 = vunpack.c.l.b16 %v47
  %v145 = vunpack.c.h.b16 %v47
  %v146 = vunpack.c.l.b16 %v48
  %v147 = vunpack.c.h.b16 %v48
  %v148 = vunpack.c.l.b16 %v49
  %v149 = vunpack.c.h.b16 %v49
  %v150 = vunpack.c.l.b16 %v50
  %v151 = vunpack.c.h.b16 %v50
  %v152 = vunpack.c.l.b16 %v51
  %v153 = vunpack.c.h.b16 %v51
  %v154 = vpack.c.b16 %v94, %v90
  %v155 = vpack.c.b16 %v95, %v91
  %v156 = vpack.c.b16 %v96, %v92
  %v157 = vpack.c.b16 %v97, %v93
  %v158 = vpack.c.b16 %v102, %v98
  %v159 = vpack.c.b16 %v103, %v99
  %v160 = vpack.c.b16 %v104, %v100
  %v161 = vpack.c.b16 %v105, %v101
  %v162 = vpack.c.b16 %v110, %v106
  %v163 = vpack.c.b16 %v111, %v107
  %v164 = vpack.c.b16 %v112, %v108
  %v165 = vpack.c.b16 %v113, %v109
  %v166 = vpack.c.b16 %v118, %v114
  %v167 = vpack.c.b16 %v119, %v115
  %v168 = vpack.c.b16 %v120, %v116
  %v169 = vpack.c.b16 %v121, %v117
  %v170 = vpack.c.b16 %v126, %v122
  %v171 = vpack.c.b16 %v127, %v123
  %v172 = vpack.c.b16 %v128, %v124
  %v173 = vpack.c.b16 %v129, %v125
  %v174 = vpack.c.b16 %v134, %v130
  %v175 = vpack.c.b16 %v135, %v131
  %v176 = vpack.c.b16 %v136, %v132
  %v177 = vpack.c.b16 %v137, %v133
  %v178 = vpack.c.b16 %v142, %v138
  %v179 = vpack.c.b16 %v143, %v139
  %v180 = vpack.c.b16 %v144, %v140
  %v181 = vpack.c.b16 %v145, %v141
  %v182 = vpack.c.b16 %v150, %v146
  %v183 = vpack.c.b16 %v151, %v147
  %v184 = vpack.c.b16 %v152, %v148
  %v185 = vpack.c.b16 %v153, %v149
  %218 = vmatprep.subr.bf16.mxu0 %v155
  %219 = vmatpush1.bf16.msra.mxu0 %v154
  %220 = vmatprep.subr.bf16.mxu0 %v159
  %221 = vmatpush1.bf16.msra.mxu0 %v158
  %222 = vmatprep.subr.bf16.mxu0 %v163
  %223 = vmatpush1.bf16.msra.mxu0 %v162
  %224 = vmatprep.subr.bf16.mxu0 %v167
  %225 = vmatpush1.bf16.msra.mxu0 %v166
  %226 = vmatprep.subr.bf16.mxu0 %v171
  %227 = vmatpush1.bf16.msra.mxu0 %v170
  %228 = vmatprep.subr.bf16.mxu0 %v175
  %229 = vmatpush1.bf16.msra.mxu0 %v174
  %230 = vmatprep.subr.bf16.mxu0 %v179
  %231 = vmatpush1.bf16.msra.mxu0 %v178
  %232 = vmatprep.subr.bf16.mxu0 %v183
  %233 = vmatpush1.bf16.msra.mxu0 %v182
  %234 = vmatprep.subr.bf16.mxu0 0
  %235 = vmatpush1.bf16.msra.mxu0 0
  %236 = vmatprep.subr.bf16.mxu0 0
  %237 = vmatpush1.bf16.msra.mxu0 0
  %238 = vmatprep.subr.bf16.mxu0 0
  %239 = vmatpush1.bf16.msra.mxu0 0
  %240 = vmatprep.subr.bf16.mxu0 0
  %241 = vmatpush1.bf16.msra.mxu0 0
  %242 = vmatprep.subr.bf16.mxu0 0
  %243 = vmatpush1.bf16.msra.mxu0 0
  %244 = vmatprep.subr.bf16.mxu0 0
  %245 = vmatpush1.bf16.msra.mxu0 0
  %246 = vmatprep.subr.bf16.mxu0 0
  %247 = vmatpush1.bf16.msra.mxu0 0
  %248 = vmatprep.subr.bf16.mxu0 0
  %249 = vmatpush1.bf16.msra.mxu0 0
  %250 = vmatprep.mubr.bf16.mxu0 0
  %251 = vmatmul.mubr.bf16.gmra.mrb[0].mxu0 %v56
  %v252 = vpop.f32.mrb[0].mxu0
  %v253 = vadd.f32 0.0, %v252
  %v254 = vpop.f32.mrb[0].mxu0
  %v255 = vadd.f32 0.0, %v254
  %v256 = vpop.f32.mrb[0].mxu0
  %v257 = vadd.f32 0.0, %v256
  %v258 = vpop.f32.mrb[0].mxu0
  %v259 = vadd.f32 0.0, %v258
  %260 = vdwg.mxu0
  %261 = vmatprep.subr.bf16.mxu0 %v157
  %262 = vmatpush1.bf16.msra.mxu0 %v156
  %263 = vmatprep.subr.bf16.mxu0 %v161
  %264 = vmatpush1.bf16.msra.mxu0 %v160
  %265 = vmatprep.subr.bf16.mxu0 %v165
  %266 = vmatpush1.bf16.msra.mxu0 %v164
  %267 = vmatprep.subr.bf16.mxu0 %v169
  %268 = vmatpush1.bf16.msra.mxu0 %v168
  %269 = vmatprep.subr.bf16.mxu0 %v173
  %270 = vmatpush1.bf16.msra.mxu0 %v172
  %271 = vmatprep.subr.bf16.mxu0 %v177
  %272 = vmatpush1.bf16.msra.mxu0 %v176
  %273 = vmatprep.subr.bf16.mxu0 %v181
  %274 = vmatpush1.bf16.msra.mxu0 %v180
  %275 = vmatprep.subr.bf16.mxu0 %v185
  %276 = vmatpush1.bf16.msra.mxu0 %v184
  %277 = vmatprep.subr.bf16.mxu0 0
  %278 = vmatpush1.bf16.msra.mxu0 0
  %279 = vmatprep.subr.bf16.mxu0 0
  %280 = vmatpush1.bf16.msra.mxu0 0
  %281 = vmatprep.subr.bf16.mxu0 0
  %282 = vmatpush1.bf16.msra.mxu0 0
  %283 = vmatprep.subr.bf16.mxu0 0
  %284 = vmatpush1.bf16.msra.mxu0 0
  %285 = vmatprep.subr.bf16.mxu0 0
  %286 = vmatpush1.bf16.msra.mxu0 0
  %287 = vmatprep.subr.bf16.mxu0 0
  %288 = vmatpush1.bf16.msra.mxu0 0
  %289 = vmatprep.subr.bf16.mxu0 0
  %290 = vmatpush1.bf16.msra.mxu0 0
  %291 = vmatprep.subr.bf16.mxu0 0
  %292 = vmatpush1.bf16.msra.mxu0 0
  %293 = vmatprep.mubr.bf16.mxu0 0
  %294 = vmatmul.mubr.bf16.gmra.mrb[0].mxu0 %v56
  %v295 = vpop.f32.mrb[0].mxu0
  %v296 = vadd.f32 0.0, %v295
  %v297 = vpop.f32.mrb[0].mxu0
  %v298 = vadd.f32 0.0, %v297
  %v299 = vpop.f32.mrb[0].mxu0
  %v300 = vadd.f32 0.0, %v299
  %v301 = vpop.f32.mrb[0].mxu0
  %v302 = vadd.f32 0.0, %v301
  %303 = vdwg.mxu0
  %v304 = vadd.f32 %v253, %v255
  %v305 = vadd.f32 %v304, %v296
  %v306 = vadd.f32 %v305, %v298
  %307 = vadd.xlane.f32.xlu0 %v306
  %v308 = vpop.xlane.xlu0 %307
  %v309 = vadd.f32 %v257, %v259
  %v310 = vadd.f32 %v309, %v300
  %v311 = vadd.f32 %v310, %v302
  %312 = vadd.xlane.f32.xlu0 %v311
  %v313 = vpop.xlane.xlu0 %312
  %v314 = vmul.f32 %v308, 0.001953125
  %v315 = vmul.f32 %v313, 0.001953125
  %v316 = vmul.f32 %v253, %v253
  %v317 = vmul.f32 %v255, %v255
  %v318 = vmul.f32 %v296, %v296
  %v319 = vmul.f32 %v298, %v298
  %v320 = vmul.f32 %v257, %v257
  %v321 = vmul.f32 %v259, %v259
  %v322 = vmul.f32 %v300, %v300
  %v323 = vmul.f32 %v302, %v302
  %v324 = vadd.f32 %v316, %v317
  %v325 = vadd.f32 %v324, %v318
  %v326 = vadd.f32 %v325, %v319
  %327 = vadd.xlane.f32.xlu0 %v326
  %v328 = vpop.xlane.xlu0 %327
  %v329 = vadd.f32 %v320, %v321
  %v330 = vadd.f32 %v329, %v322
  %v331 = vadd.f32 %v330, %v323
  %332 = vadd.xlane.f32.xlu0 %v331
  %v333 = vpop.xlane.xlu0 %332
  %v334 = vmul.f32 %v328, 0.001953125
  %v335 = vmul.f32 %v333, 0.001953125
  %v336 = vmul.f32 %v314, %v314
  %v337 = vmul.f32 %v315, %v315
  %v338 = vsub.f32 %v334, %v336
  %v339 = vsub.f32 %v335, %v337
  %v340 = vsub.f32 %v253, %v314
  %v341 = vsub.f32 %v255, %v314
  %v342 = vsub.f32 %v296, %v314
  %v343 = vsub.f32 %v298, %v314
  %v344 = vsub.f32 %v257, %v315
  %v345 = vsub.f32 %v259, %v315
  %v346 = vsub.f32 %v300, %v315
  %v347 = vsub.f32 %v302, %v315
  %v348 = vmax.f32 %v338, 0.0
  %v349 = vmax.f32 %v339, 0.0
  %v350 = vadd.f32 %v348, 1e-05
  %v351 = vadd.f32 %v349, 1e-05
  %v352 = vrsqrt.pop %v350
  %v353 = vrsqrt.pop %v351
  %v354 = vmul.f32 %v340, %v352
  %v355 = vmul.f32 %v341, %v352
  %v356 = vmul.f32 %v342, %v352
  %v357 = vmul.f32 %v343, %v352
  %v358 = vmul.f32 %v344, %v353
  %v359 = vmul.f32 %v345, %v353
  %v360 = vmul.f32 %v346, %v353
  %v361 = vmul.f32 %v347, %v353
  %v362 = vld [vmem:[%s2] sm:$0xff]
  %v363 = vld [vmem:[%s2 + $0x8] sm:$0xff]
  %365 = vset.pattern.permute.xlu0 0
  %366 = vperm.xlu0 %365, %v362
  %v367 = vpop.permute.xlu0 %366
  %370 = vset.pattern.permute.xlu0 0
  %371 = vperm.xlu0 %370, %v363
  %v372 = vpop.permute.xlu0 %371
  %v374 = vmul.f32 %v354, %v367
  %v375 = vmul.f32 %v355, %v367
  %v376 = vmul.f32 %v356, %v367
  %v377 = vmul.f32 %v357, %v367
  %v378 = vmul.f32 %v358, %v372
  %v379 = vmul.f32 %v359, %v372
  %v380 = vmul.f32 %v360, %v372
  %v381 = vmul.f32 %v361, %v372
  %v382 = vld [vmem:[%s3] sm:$0xff]
  %v383 = vld [vmem:[%s3 + $0x8] sm:$0xff]
  %385 = vset.pattern.permute.xlu0 0
  %386 = vperm.xlu0 %385, %v382
  %v387 = vpop.permute.xlu0 %386
  %390 = vset.pattern.permute.xlu0 0
  %391 = vperm.xlu0 %390, %v383
  %v392 = vpop.permute.xlu0 %391
  %v394 = vadd.f32 %v374, %v387
  %v395 = vadd.f32 %v375, %v387
  %v396 = vadd.f32 %v376, %v387
  %v397 = vadd.f32 %v377, %v387
  %v398 = vadd.f32 %v378, %v392
  %v399 = vadd.f32 %v379, %v392
  %v400 = vadd.f32 %v380, %v392
  %v401 = vadd.f32 %v381, %v392
  %v402 = vmul.f32 %v394, 0.2
  %v403 = vmul.f32 %v395, 0.2
  %v404 = vmul.f32 %v396, 0.2
  %v405 = vmul.f32 %v397, 0.2
  %v406 = vmul.f32 %v398, 0.2
  %v407 = vmul.f32 %v399, 0.2
  %v408 = vmul.f32 %v400, 0.2
  %v409 = vmul.f32 %v401, 0.2
  %v410 = vmax.f32 %v394, %v402
  %v411 = vmax.f32 %v395, %v403
  %v412 = vmax.f32 %v396, %v404
  %v413 = vmax.f32 %v397, %v405
  %v414 = vmax.f32 %v398, %v406
  %v415 = vmax.f32 %v399, %v407
  %v416 = vmax.f32 %v400, %v408
  %v417 = vmax.f32 %v401, %v409
  %418 = vst [vmem:[%s4] sm:$0xff] %v410
  %419 = vst [vmem:[%s4 + $0x8] sm:$0xff] %v411
  %420 = vst [vmem:[%s4 + $0x10] sm:$0xff] %v412
  %421 = vst [vmem:[%s4 + $0x18] sm:$0xff] %v413
  %422 = vst [vmem:[%s4 + $0x20] sm:$0xff] %v414
  %423 = vst [vmem:[%s4 + $0x28] sm:$0xff] %v415
  %424 = vst [vmem:[%s4 + $0x30] sm:$0xff] %v416
  %425 = vst [vmem:[%s4 + $0x38] sm:$0xff] %v417
  // Predicated region
  $region18: #{dnet_forward.5} parent=0 // pred_check
    _
  $region19: #{dnet_forward.5} parent=0 // pred_check_branch
    %427 = sbr.rel (0) target = $region21
  $region20: #{dnet_forward.5} parent=0 // pred_region
    _
  $region21: #{dnet_forward.5} parent=0 // pred_fallthru
    _
  // Predicated region
  $region22: #{dnet_forward.5} parent=0 // pred_check
    _
  $region23: #{dnet_forward.5} parent=0 // pred_check_branch
    %429 = sbr.rel (0) target = $region25
  $region24: #{dnet_forward.5} parent=0 // pred_region
    _
  $region25: #{dnet_forward.5} parent=0 // pred_fallthru
    _

// kernel: dnet_forward.6
$region0: #{dnet_forward.6}
  #allocation0 [shape = 'u32[]', space=smem, size = 0x4, offset = 0x4, fixed_abs, tag = 'smem constant byte address 0x4 - core index']
  #allocation1 [shape = 'u32[144,128]{1,0:T(1,128)}', space=vmem, size = 0x12000, scoped, tag = 'internal scratch']
  %s0 = inlined_call_operand.vmem [shape: bf16[256,128], index: 0, kind: input, shape index: {}]
  %s1 = inlined_call_operand.vmem [shape: bf16[32,256], index: 1, kind: input, shape index: {}]
  %s2 = inlined_call_operand.vmem [shape: f32[32,1], index: 2, kind: input, shape index: {}]
  %s3 = inlined_call_operand.vmem [shape: f32[32,1], index: 3, kind: input, shape index: {}]
  %s4 = inlined_call_operand.vmem [shape: f32[32,128], index: 4, kind: output, shape index: {}]
  %s5 = sld [smem:[#allocation0]]
  $region26: #{dnet_forward.6} parent=0
    _
  %s7 = ssub.s32 1, %s5
  %s8 = scalar_select 0, %s7, %s5
  // Predicated region
  $region2: #{dnet_forward.6} parent=0 // pred_check
    _
  $region3: #{dnet_forward.6} parent=0 // pred_check_branch
    %10 = sbr.rel (0) target = $region5
  $region4: #{dnet_forward.6} parent=0 // pred_region
    _
  $region5: #{dnet_forward.6} parent=0 // pred_fallthru
    _
  // Predicated region
  $region6: #{dnet_forward.6} parent=0 // pred_check
    _
  $region7: #{dnet_forward.6} parent=0 // pred_check_branch
    %12 = sbr.rel (0) target = $region9
  $region8: #{dnet_forward.6} parent=0 // pred_region
    _
  $region9: #{dnet_forward.6} parent=0 // pred_fallthru
    _
  // Predicated region
  $region10: #{dnet_forward.6} parent=0 // pred_check
    _
  $region11: #{dnet_forward.6} parent=0 // pred_check_branch
    %14 = sbr.rel (0) target = $region13
  $region12: #{dnet_forward.6} parent=0 // pred_region
    _
  $region13: #{dnet_forward.6} parent=0 // pred_fallthru
    _
  // Predicated region
  $region14: #{dnet_forward.6} parent=0 // pred_check
    _
  $region15: #{dnet_forward.6} parent=0 // pred_check_branch
    %16 = sbr.rel (0) target = $region17
  $region16: #{dnet_forward.6} parent=0 // pred_region
    _
  $region17: #{dnet_forward.6} parent=0 // pred_fallthru
    _
  %v18 = vld [vmem:[%s1] sm:$0xff]
  %v19 = vld [vmem:[%s1 + $0x8] sm:$0xff]
  %v20 = vld [vmem:[%s1 + $0x10] sm:$0xff]
  %v21 = vld [vmem:[%s1 + $0x18] sm:$0xff]
  %v22 = vld [vmem:[%s0] sm:$0xf]
  %v23 = vld [vmem:[%s0 + $0x4] sm:$0xf]
  %v24 = vld [vmem:[%s0 + $0x8] sm:$0xf]
  %v25 = vld [vmem:[%s0 + $0xc] sm:$0xf]
  %v26 = vld [vmem:[%s0 + $0x10] sm:$0xf]
  %v27 = vld [vmem:[%s0 + $0x14] sm:$0xf]
  %v28 = vld [vmem:[%s0 + $0x18] sm:$0xf]
  %v29 = vld [vmem:[%s0 + $0x1c] sm:$0xf]
  %v30 = vld [vmem:[%s0 + $0x20] sm:$0xf]
  %v31 = vld [vmem:[%s0 + $0x24] sm:$0xf]
  %v32 = vld [vmem:[%s0 + $0x28] sm:$0xf]
  %v33 = vld [vmem:[%s0 + $0x2c] sm:$0xf]
  %v34 = vld [vmem:[%s0 + $0x30] sm:$0xf]
  %v35 = vld [vmem:[%s0 + $0x34] sm:$0xf]
  %v36 = vld [vmem:[%s0 + $0x38] sm:$0xf]
  %v37 = vld [vmem:[%s0 + $0x3c] sm:$0xf]
  %v38 = vld [vmem:[%s0 + $0x40] sm:$0xf]
  %v39 = vld [vmem:[%s0 + $0x44] sm:$0xf]
  %v40 = vld [vmem:[%s0 + $0x48] sm:$0xf]
  %v41 = vld [vmem:[%s0 + $0x4c] sm:$0xf]
  %v42 = vld [vmem:[%s0 + $0x50] sm:$0xf]
  %v43 = vld [vmem:[%s0 + $0x54] sm:$0xf]
  %v44 = vld [vmem:[%s0 + $0x58] sm:$0xf]
  %v45 = vld [vmem:[%s0 + $0x5c] sm:$0xf]
  %v46 = vld [vmem:[%s0 + $0x60] sm:$0xf]
  %v47 = vld [vmem:[%s0 + $0x64] sm:$0xf]
  %v48 = vld [vmem:[%s0 + $0x68] sm:$0xf]
  %v49 = vld [vmem:[%s0 + $0x6c] sm:$0xf]
  %v50 = vld [vmem:[%s0 + $0x70] sm:$0xf]
  %v51 = vld [vmem:[%s0 + $0x74] sm:$0xf]
  %v52 = vld [vmem:[%s0 + $0x78] sm:$0xf]
  %v53 = vld [vmem:[%s0 + $0x7c] sm:$0xf]
  %v58 = vunpack.c.l.b16 %v18
  %v59 = vunpack.c.h.b16 %v18
  %v60 = vunpack.c.l.b16 %v19
  %v61 = vunpack.c.h.b16 %v19
  %v62 = vunpack.c.l.b16 %v20
  %v63 = vunpack.c.h.b16 %v20
  %v64 = vunpack.c.l.b16 %v21
  %v65 = vunpack.c.h.b16 %v21
  %v66 = vpack.c.b16 %v60, %v58
  %v67 = vpack.c.b16 %v61, %v59
  %v68 = vpack.c.b16 %v64, %v62
  %v69 = vpack.c.b16 %v65, %v63
  %v106 = vunpack.c.l.b16 %v22
  %v107 = vunpack.c.l.b16 %v23
  %v108 = vunpack.c.l.b16 %v24
  %v109 = vunpack.c.l.b16 %v25
  %v110 = vunpack.c.l.b16 %v26
  %v111 = vunpack.c.l.b16 %v27
  %v112 = vunpack.c.l.b16 %v28
  %v113 = vunpack.c.l.b16 %v29
  %v114 = vunpack.c.l.b16 %v30
  %v115 = vunpack.c.l.b16 %v31
  %v116 = vunpack.c.l.b16 %v32
  %v117 = vunpack.c.l.b16 %v33
  %v118 = vunpack.c.l.b16 %v34
  %v119 = vunpack.c.l.b16 %v35
  %v120 = vunpack.c.l.b16 %v36
  %v121 = vunpack.c.l.b16 %v37
  %v122 = vunpack.c.l.b16 %v38
  %v123 = vunpack.c.l.b16 %v39
  %v124 = vunpack.c.l.b16 %v40
  %v125 = vunpack.c.l.b16 %v41
  %v126 = vunpack.c.l.b16 %v42
  %v127 = vunpack.c.l.b16 %v43
  %v128 = vunpack.c.l.b16 %v44
  %v129 = vunpack.c.l.b16 %v45
  %v130 = vunpack.c.l.b16 %v46
  %v131 = vunpack.c.l.b16 %v47
  %v132 = vunpack.c.l.b16 %v48
  %v133 = vunpack.c.l.b16 %v49
  %v134 = vunpack.c.l.b16 %v50
  %v135 = vunpack.c.l.b16 %v51
  %v136 = vunpack.c.l.b16 %v52
  %v137 = vunpack.c.l.b16 %v53
  %v138 = vpack.c.b16 %v107, %v106
  %v139 = vpack.c.b16 %v109, %v108
  %v140 = vpack.c.b16 %v111, %v110
  %v141 = vpack.c.b16 %v113, %v112
  %v142 = vpack.c.b16 %v115, %v114
  %v143 = vpack.c.b16 %v117, %v116
  %v144 = vpack.c.b16 %v119, %v118
  %v145 = vpack.c.b16 %v121, %v120
  %v146 = vpack.c.b16 %v123, %v122
  %v147 = vpack.c.b16 %v125, %v124
  %v148 = vpack.c.b16 %v127, %v126
  %v149 = vpack.c.b16 %v129, %v128
  %v150 = vpack.c.b16 %v131, %v130
  %v151 = vpack.c.b16 %v133, %v132
  %v152 = vpack.c.b16 %v135, %v134
  %v153 = vpack.c.b16 %v137, %v136
  %170 = vmatprep.subr.bf16.mxu0 0
  %171 = vmatpush1.bf16.msra.mxu0 %v138
  %172 = vmatprep.subr.bf16.mxu0 0
  %173 = vmatpush1.bf16.msra.mxu0 %v139
  %174 = vmatprep.subr.bf16.mxu0 0
  %175 = vmatpush1.bf16.msra.mxu0 %v140
  %176 = vmatprep.subr.bf16.mxu0 0
  %177 = vmatpush1.bf16.msra.mxu0 %v141
  %178 = vmatprep.subr.bf16.mxu0 0
  %179 = vmatpush1.bf16.msra.mxu0 %v142
  %180 = vmatprep.subr.bf16.mxu0 0
  %181 = vmatpush1.bf16.msra.mxu0 %v143
  %182 = vmatprep.subr.bf16.mxu0 0
  %183 = vmatpush1.bf16.msra.mxu0 %v144
  %184 = vmatprep.subr.bf16.mxu0 0
  %185 = vmatpush1.bf16.msra.mxu0 %v145
  %186 = vmatprep.subr.bf16.mxu0 0
  %187 = vmatpush1.bf16.msra.mxu0 %v146
  %188 = vmatprep.subr.bf16.mxu0 0
  %189 = vmatpush1.bf16.msra.mxu0 %v147
  %190 = vmatprep.subr.bf16.mxu0 0
  %191 = vmatpush1.bf16.msra.mxu0 %v148
  %192 = vmatprep.subr.bf16.mxu0 0
  %193 = vmatpush1.bf16.msra.mxu0 %v149
  %194 = vmatprep.subr.bf16.mxu0 0
  %195 = vmatpush1.bf16.msra.mxu0 %v150
  %196 = vmatprep.subr.bf16.mxu0 0
  %197 = vmatpush1.bf16.msra.mxu0 %v151
  %198 = vmatprep.subr.bf16.mxu0 0
  %199 = vmatpush1.bf16.msra.mxu0 %v152
  %200 = vmatprep.subr.bf16.mxu0 0
  %201 = vmatpush1.bf16.msra.mxu0 %v153
  %202 = vmatprep.mubr.bf16.mxu0 %v67
  %203 = vmatmul.mubr.bf16.gmra.mrb[0].mxu0 %v66
  %v204 = vpop.f32.mrb[0].mxu0
  %v205 = vadd.f32 0.0, %v204
  %v206 = vpop.f32.mrb[0].mxu0
  %v207 = vpop.f32.mrb[0].mxu0
  %v208 = vadd.f32 0.0, %v207
  %v209 = vpop.f32.mrb[0].mxu0
  %210 = vmatprep.mubr.bf16.mxu0 %v69
  %211 = vmatmul.mubr.bf16.gmra.mrb[0].mxu0 %v68
  %v212 = vpop.f32.mrb[0].mxu0
  %v213 = vadd.f32 0.0, %v212
  %v214 = vpop.f32.mrb[0].mxu0
  %v215 = vpop.f32.mrb[0].mxu0
  %v216 = vadd.f32 0.0, %v215
  %v217 = vpop.f32.mrb[0].mxu0
  %218 = vdwg.mxu0
  %219 = vadd.xlane.f32.xlu0 %v205
  %v220 = vpop.xlane.xlu0 %219
  %221 = vadd.xlane.f32.xlu0 %v208
  %v222 = vpop.xlane.xlu0 %221
  %223 = vadd.xlane.f32.xlu0 %v213
  %v224 = vpop.xlane.xlu0 %223
  %225 = vadd.xlane.f32.xlu0 %v216
  %v226 = vpop.xlane.xlu0 %225
  %v227 = vmul.f32 %v220, 0.0078125
  %v228 = vmul.f32 %v222, 0.0078125
  %v229 = vmul.f32 %v224, 0.0078125
  %v230 = vmul.f32 %v226, 0.0078125
  %v231 = vmul.f32 %v205, %v205
  %v232 = vmul.f32 %v208, %v208
  %v233 = vmul.f32 %v213, %v213
  %v234 = vmul.f32 %v216, %v216
  %235 = vadd.xlane.f32.xlu0 %v231
  %v236 = vpop.xlane.xlu0 %235
  %237 = vadd.xlane.f32.xlu0 %v232
  %v238 = vpop.xlane.xlu0 %237
  %239 = vadd.xlane.f32.xlu0 %v233
  %v240 = vpop.xlane.xlu0 %239
  %241 = vadd.xlane.f32.xlu0 %v234
  %v242 = vpop.xlane.xlu0 %241
  %v243 = vmul.f32 %v236, 0.0078125
  %v244 = vmul.f32 %v238, 0.0078125
  %v245 = vmul.f32 %v240, 0.0078125
  %v246 = vmul.f32 %v242, 0.0078125
  %v247 = vmul.f32 %v227, %v227
  %v248 = vmul.f32 %v228, %v228
  %v249 = vmul.f32 %v229, %v229
  %v250 = vmul.f32 %v230, %v230
  %v251 = vsub.f32 %v243, %v247
  %v252 = vsub.f32 %v244, %v248
  %v253 = vsub.f32 %v245, %v249
  %v254 = vsub.f32 %v246, %v250
  %v255 = vsub.f32 %v205, %v227
  %v256 = vsub.f32 %v208, %v228
  %v257 = vsub.f32 %v213, %v229
  %v258 = vsub.f32 %v216, %v230
  %v259 = vmax.f32 %v251, 0.0
  %v260 = vmax.f32 %v252, 0.0
  %v261 = vmax.f32 %v253, 0.0
  %v262 = vmax.f32 %v254, 0.0
  %v263 = vadd.f32 %v259, 1e-05
  %v264 = vadd.f32 %v260, 1e-05
  %v265 = vadd.f32 %v261, 1e-05
  %v266 = vadd.f32 %v262, 1e-05
  %v267 = vrsqrt.pop %v263
  %v268 = vrsqrt.pop %v264
  %v269 = vrsqrt.pop %v265
  %v270 = vrsqrt.pop %v266
  %v271 = vmul.f32 %v255, %v267
  %v272 = vmul.f32 %v256, %v268
  %v273 = vmul.f32 %v257, %v269
  %v274 = vmul.f32 %v258, %v270
  %v275 = vld [vmem:[%s2] sm:$0xff]
  %v276 = vld [vmem:[%s2 + $0x8] sm:$0xff]
  %v277 = vld [vmem:[%s2 + $0x10] sm:$0xff]
  %v278 = vld [vmem:[%s2 + $0x18] sm:$0xff]
  %280 = vset.pattern.permute.xlu0 0
  %281 = vperm.xlu0 %280, %v275
  %v282 = vpop.permute.xlu0 %281
  %285 = vset.pattern.permute.xlu0 0
  %286 = vperm.xlu0 %285, %v276
  %v287 = vpop.permute.xlu0 %286
  %290 = vset.pattern.permute.xlu0 0
  %291 = vperm.xlu0 %290, %v277
  %v292 = vpop.permute.xlu0 %291
  %295 = vset.pattern.permute.xlu0 0
  %296 = vperm.xlu0 %295, %v278
  %v297 = vpop.permute.xlu0 %296
  %v299 = vmul.f32 %v271, %v282
  %v300 = vmul.f32 %v272, %v287
  %v301 = vmul.f32 %v273, %v292
  %v302 = vmul.f32 %v274, %v297
  %v303 = vld [vmem:[%s3] sm:$0xff]
  %v304 = vld [vmem:[%s3 + $0x8] sm:$0xff]
  %v305 = vld [vmem:[%s3 + $0x10] sm:$0xff]
  %v306 = vld [vmem:[%s3 + $0x18] sm:$0xff]
  %308 = vset.pattern.permute.xlu0 0
  %309 = vperm.xlu0 %308, %v303
  %v310 = vpop.permute.xlu0 %309
  %313 = vset.pattern.permute.xlu0 0
  %314 = vperm.xlu0 %313, %v304
  %v315 = vpop.permute.xlu0 %314
  %318 = vset.pattern.permute.xlu0 0
  %319 = vperm.xlu0 %318, %v305
  %v320 = vpop.permute.xlu0 %319
  %323 = vset.pattern.permute.xlu0 0
  %324 = vperm.xlu0 %323, %v306
  %v325 = vpop.permute.xlu0 %324
  %v327 = vadd.f32 %v299, %v310
  %v328 = vadd.f32 %v300, %v315
  %v329 = vadd.f32 %v301, %v320
  %v330 = vadd.f32 %v302, %v325
  %v331 = vmul.f32 %v327, 0.2
  %v332 = vmul.f32 %v328, 0.2
  %v333 = vmul.f32 %v329, 0.2
  %v334 = vmul.f32 %v330, 0.2
  %v335 = vmax.f32 %v327, %v331
  %v336 = vmax.f32 %v328, %v332
  %v337 = vmax.f32 %v329, %v333
  %v338 = vmax.f32 %v330, %v334
  %339 = vst [vmem:[%s4] sm:$0xff] %v335
  %340 = vst [vmem:[%s4 + $0x8] sm:$0xff] %v336
  %341 = vst [vmem:[%s4 + $0x10] sm:$0xff] %v337
  %342 = vst [vmem:[%s4 + $0x18] sm:$0xff] %v338
  // Predicated region
  $region18: #{dnet_forward.6} parent=0 // pred_check
    _
  $region19: #{dnet_forward.6} parent=0 // pred_check_branch
    %344 = sbr.rel (0) target = $region21
  $region20: #{dnet_forward.6} parent=0 // pred_region
    _
  $region21: #{dnet_forward.6} parent=0 // pred_fallthru
    _
  // Predicated region
  $region22: #{dnet_forward.6} parent=0 // pred_check
    _
  $region23: #{dnet_forward.6} parent=0 // pred_check_branch
    %346 = sbr.rel (0) target = $region25
  $region24: #{dnet_forward.6} parent=0 // pred_region
    _
  $region25: #{dnet_forward.6} parent=0 // pred_fallthru
    _

// kernel: dnet_forward.7
$region0: #{dnet_forward.7}
  #allocation0 [shape = 'u32[]', space=smem, size = 0x4, offset = 0x4, fixed_abs, tag = 'smem constant byte address 0x4 - core index']
  #allocation1 [shape = 'u32[144,128]{1,0:T(1,128)}', space=vmem, size = 0x12000, scoped, tag = 'internal scratch']
  %s0 = inlined_call_operand.vmem [shape: bf16[512,32], index: 0, kind: input, shape index: {}]
  %s1 = inlined_call_operand.vmem [shape: bf16[64,512], index: 1, kind: input, shape index: {}]
  %s2 = inlined_call_operand.vmem [shape: f32[64,1], index: 2, kind: input, shape index: {}]
  %s3 = inlined_call_operand.vmem [shape: f32[64,1], index: 3, kind: input, shape index: {}]
  %s4 = inlined_call_operand.vmem [shape: f32[64,32], index: 4, kind: input, shape index: {}]
  %s5 = inlined_call_operand.vmem [shape: f32[32,2], index: 5, kind: input, shape index: {}]
  %s6 = inlined_call_operand.hbm [shape: f32[1,2], index: 6, kind: output, shape index: {}]
  %s7 = sld [smem:[#allocation0]]
  $region34: #{dnet_forward.7} parent=0
    _
  %s9 = ssub.s32 1, %s7
  %s10 = scalar_select 0, %s9, %s7
  $region1: #{dnet_forward.7} parent=0
    #allocation2 [shape = 'u8[512]{0}', space=vmem, size = 0x400, scoped, tag = 'output window, operand 0, single buffered']
    #allocation3 [shape = 's32[1]{0}', space=sflag, size = 0x4, scoped, tag = 'scoped memory for dnet_forward.7']
    %11 = vsyncpa [#allocation3], 0
    // Predicated region
    $region2: #{dnet_forward.7} parent=1 // pred_check
      _
    $region3: #{dnet_forward.7} parent=1 // pred_check_branch
      %13 = sbr.rel (0) target = $region5
    $region4: #{dnet_forward.7} parent=1 // pred_region
      _
    $region5: #{dnet_forward.7} parent=1 // pred_fallthru
      _
    // Predicated region
    $region6: #{dnet_forward.7} parent=1 // pred_check
      _
    $region7: #{dnet_forward.7} parent=1 // pred_check_branch
      %15 = sbr.rel (0) target = $region9
    $region8: #{dnet_forward.7} parent=1 // pred_region
      _
    $region9: #{dnet_forward.7} parent=1 // pred_fallthru
      _
    // Predicated region
    $region10: #{dnet_forward.7} parent=1 // pred_check
      _
    $region11: #{dnet_forward.7} parent=1 // pred_check_branch
      %17 = sbr.rel (0) target = $region13
    $region12: #{dnet_forward.7} parent=1 // pred_region
      _
    $region13: #{dnet_forward.7} parent=1 // pred_fallthru
      _
    // Predicated region
    $region14: #{dnet_forward.7} parent=1 // pred_check
      _
    $region15: #{dnet_forward.7} parent=1 // pred_check_branch
      %19 = sbr.rel (0) target = $region17
    $region16: #{dnet_forward.7} parent=1 // pred_region
      _
    $region17: #{dnet_forward.7} parent=1 // pred_fallthru
      _
    // Predicated region
    $region18: #{dnet_forward.7} parent=1 // pred_check
      _
    $region19: #{dnet_forward.7} parent=1 // pred_check_branch
      %21 = sbr.rel (0) target = $region21
    $region20: #{dnet_forward.7} parent=1 // pred_region
      _
    $region21: #{dnet_forward.7} parent=1 // pred_fallthru
      _
    // Predicated region
    $region22: #{dnet_forward.7} parent=1 // pred_check
      _
    $region23: #{dnet_forward.7} parent=1 // pred_check_branch
      %23 = sbr.rel (0) target = $region25
    $region24: #{dnet_forward.7} parent=1 // pred_region
      _
    $region25: #{dnet_forward.7} parent=1 // pred_fallthru
      _
    %v25 = vld [vmem:[%s1] sm:$0xff]
    %v26 = vld [vmem:[%s1 + $0x8] sm:$0xff]
    %v27 = vld [vmem:[%s1 + $0x10] sm:$0xff]
    %v28 = vld [vmem:[%s1 + $0x18] sm:$0xff]
    %v29 = vld [vmem:[%s1 + $0x20] sm:$0xff]
    %v30 = vld [vmem:[%s1 + $0x28] sm:$0xff]
    %v31 = vld [vmem:[%s1 + $0x30] sm:$0xff]
    %v32 = vld [vmem:[%s1 + $0x38] sm:$0xff]
    %v33 = vld [vmem:[%s1 + $0x40] sm:$0xff]
    %v34 = vld [vmem:[%s1 + $0x48] sm:$0xff]
    %v35 = vld [vmem:[%s1 + $0x50] sm:$0xff]
    %v36 = vld [vmem:[%s1 + $0x58] sm:$0xff]
    %v37 = vld [vmem:[%s1 + $0x60] sm:$0xff]
    %v38 = vld [vmem:[%s1 + $0x68] sm:$0xff]
    %v39 = vld [vmem:[%s1 + $0x70] sm:$0xff]
    %v40 = vld [vmem:[%s1 + $0x78] sm:$0xff]
    %v41 = vld [vmem:[%s0] sm:$0xf]
    %v42 = vld [vmem:[%s0 + $0x4] sm:$0xf]
    %v43 = vld [vmem:[%s0 + $0x8] sm:$0xf]
    %v44 = vld [vmem:[%s0 + $0xc] sm:$0xf]
    %v45 = vld [vmem:[%s0 + $0x10] sm:$0xf]
    %v46 = vld [vmem:[%s0 + $0x14] sm:$0xf]
    %v47 = vld [vmem:[%s0 + $0x18] sm:$0xf]
    %v48 = vld [vmem:[%s0 + $0x1c] sm:$0xf]
    %v49 = vld [vmem:[%s0 + $0x20] sm:$0xf]
    %v50 = vld [vmem:[%s0 + $0x24] sm:$0xf]
    %v51 = vld [vmem:[%s0 + $0x28] sm:$0xf]
    %v52 = vld [vmem:[%s0 + $0x2c] sm:$0xf]
    %v53 = vld [vmem:[%s0 + $0x30] sm:$0xf]
    %v54 = vld [vmem:[%s0 + $0x34] sm:$0xf]
    %v55 = vld [vmem:[%s0 + $0x38] sm:$0xf]
    %v56 = vld [vmem:[%s0 + $0x3c] sm:$0xf]
    %v57 = vld [vmem:[%s0 + $0x40] sm:$0xf]
    %v58 = vld [vmem:[%s0 + $0x44] sm:$0xf]
    %v59 = vld [vmem:[%s0 + $0x48] sm:$0xf]
    %v60 = vld [vmem:[%s0 + $0x4c] sm:$0xf]
    %v61 = vld [vmem:[%s0 + $0x50] sm:$0xf]
    %v62 = vld [vmem:[%s0 + $0x54] sm:$0xf]
    %v63 = vld [vmem:[%s0 + $0x58] sm:$0xf]
    %v64 = vld [vmem:[%s0 + $0x5c] sm:$0xf]
    %v65 = vld [vmem:[%s0 + $0x60] sm:$0xf]
    %v66 = vld [vmem:[%s0 + $0x64] sm:$0xf]
    %v67 = vld [vmem:[%s0 + $0x68] sm:$0xf]
    %v68 = vld [vmem:[%s0 + $0x6c] sm:$0xf]
    %v69 = vld [vmem:[%s0 + $0x70] sm:$0xf]
    %v70 = vld [vmem:[%s0 + $0x74] sm:$0xf]
    %v71 = vld [vmem:[%s0 + $0x78] sm:$0xf]
    %v72 = vld [vmem:[%s0 + $0x7c] sm:$0xf]
    %v73 = vld [vmem:[%s0 + $0x80] sm:$0xf]
    %v74 = vld [vmem:[%s0 + $0x84] sm:$0xf]
    %v75 = vld [vmem:[%s0 + $0x88] sm:$0xf]
    %v76 = vld [vmem:[%s0 + $0x8c] sm:$0xf]
    %v77 = vld [vmem:[%s0 + $0x90] sm:$0xf]
    %v78 = vld [vmem:[%s0 + $0x94] sm:$0xf]
    %v79 = vld [vmem:[%s0 + $0x98] sm:$0xf]
    %v80 = vld [vmem:[%s0 + $0x9c] sm:$0xf]
    %v81 = vld [vmem:[%s0 + $0xa0] sm:$0xf]
    %v82 = vld [vmem:[%s0 + $0xa4] sm:$0xf]
    %v83 = vld [vmem:[%s0 + $0xa8] sm:$0xf]
    %v84 = vld [vmem:[%s0 + $0xac] sm:$0xf]
    %v85 = vld [vmem:[%s0 + $0xb0] sm:$0xf]
    %v86 = vld [vmem:[%s0 + $0xb4] sm:$0xf]
    %v87 = vld [vmem:[%s0 + $0xb8] sm:$0xf]
    %v88 = vld [vmem:[%s0 + $0xbc] sm:$0xf]
    %v89 = vld [vmem:[%s0 + $0xc0] sm:$0xf]
    %v90 = vld [vmem:[%s0 + $0xc4] sm:$0xf]
    %v91 = vld [vmem:[%s0 + $0xc8] sm:$0xf]
    %v92 = vld [vmem:[%s0 + $0xcc] sm:$0xf]
    %v93 = vld [vmem:[%s0 + $0xd0] sm:$0xf]
    %v94 = vld [vmem:[%s0 + $0xd4] sm:$0xf]
    %v95 = vld [vmem:[%s0 + $0xd8] sm:$0xf]
    %v96 = vld [vmem:[%s0 + $0xdc] sm:$0xf]
    %v97 = vld [vmem:[%s0 + $0xe0] sm:$0xf]
    %v98 = vld [vmem:[%s0 + $0xe4] sm:$0xf]
    %v99 = vld [vmem:[%s0 + $0xe8] sm:$0xf]
    %v100 = vld [vmem:[%s0 + $0xec] sm:$0xf]
    %v101 = vld [vmem:[%s0 + $0xf0] sm:$0xf]
    %v102 = vld [vmem:[%s0 + $0xf4] sm:$0xf]
    %v103 = vld [vmem:[%s0 + $0xf8] sm:$0xf]
    %v104 = vld [vmem:[%s0 + $0xfc] sm:$0xf]
    %v121 = vunpack.c.l.b16 %v25
    %v122 = vunpack.c.h.b16 %v25
    %v123 = vunpack.c.l.b16 %v26
    %v124 = vunpack.c.h.b16 %v26
    %v125 = vunpack.c.l.b16 %v27
    %v126 = vunpack.c.h.b16 %v27
    %v127 = vunpack.c.l.b16 %v28
    %v128 = vunpack.c.h.b16 %v28
    %v129 = vunpack.c.l.b16 %v29
    %v130 = vunpack.c.h.b16 %v29
    %v131 = vunpack.c.l.b16 %v30
    %v132 = vunpack.c.h.b16 %v30
    %v133 = vunpack.c.l.b16 %v31
    %v134 = vunpack.c.h.b16 %v31
    %v135 = vunpack.c.l.b16 %v32
    %v136 = vunpack.c.h.b16 %v32
    %v137 = vunpack.c.l.b16 %v33
    %v138 = vunpack.c.h.b16 %v33
    %v139 = vunpack.c.l.b16 %v34
    %v140 = vunpack.c.h.b16 %v34
    %v141 = vunpack.c.l.b16 %v35
    %v142 = vunpack.c.h.b16 %v35
    %v143 = vunpack.c.l.b16 %v36
    %v144 = vunpack.c.h.b16 %v36
    %v145 = vunpack.c.l.b16 %v37
    %v146 = vunpack.c.h.b16 %v37
    %v147 = vunpack.c.l.b16 %v38
    %v148 = vunpack.c.h.b16 %v38
    %v149 = vunpack.c.l.b16 %v39
    %v150 = vunpack.c.h.b16 %v39
    %v151 = vunpack.c.l.b16 %v40
    %v152 = vunpack.c.h.b16 %v40
    %v153 = vpack.c.b16 %v125, %v121
    %v154 = vpack.c.b16 %v126, %v122
    %v155 = vpack.c.b16 %v127, %v123
    %v156 = vpack.c.b16 %v128, %v124
    %v157 = vpack.c.b16 %v133, %v129
    %v158 = vpack.c.b16 %v134, %v130
    %v159 = vpack.c.b16 %v135, %v131
    %v160 = vpack.c.b16 %v136, %v132
    %v161 = vpack.c.b16 %v141, %v137
    %v162 = vpack.c.b16 %v142, %v138
    %v163 = vpack.c.b16 %v143, %v139
    %v164 = vpack.c.b16 %v144, %v140
    %v165 = vpack.c.b16 %v149, %v145
    %v166 = vpack.c.b16 %v150, %v146
    %v167 = vpack.c.b16 %v151, %v147
    %v168 = vpack.c.b16 %v152, %v148
    %v249 = vunpack.c.l.b16 %v41
    %v250 = vunpack.c.l.b16 %v42
    %v251 = vunpack.c.l.b16 %v43
    %v252 = vunpack.c.l.b16 %v44
    %v253 = vunpack.c.l.b16 %v45
    %v254 = vunpack.c.l.b16 %v46
    %v255 = vunpack.c.l.b16 %v47
    %v256 = vunpack.c.l.b16 %v48
    %v257 = vunpack.c.l.b16 %v49
    %v258 = vunpack.c.l.b16 %v50
    %v259 = vunpack.c.l.b16 %v51
    %v260 = vunpack.c.l.b16 %v52
    %v261 = vunpack.c.l.b16 %v53
    %v262 = vunpack.c.l.b16 %v54
    %v263 = vunpack.c.l.b16 %v55
    %v264 = vunpack.c.l.b16 %v56
    %v265 = vunpack.c.l.b16 %v57
    %v266 = vunpack.c.l.b16 %v58
    %v267 = vunpack.c.l.b16 %v59
    %v268 = vunpack.c.l.b16 %v60
    %v269 = vunpack.c.l.b16 %v61
    %v270 = vunpack.c.l.b16 %v62
    %v271 = vunpack.c.l.b16 %v63
    %v272 = vunpack.c.l.b16 %v64
    %v273 = vunpack.c.l.b16 %v65
    %v274 = vunpack.c.l.b16 %v66
    %v275 = vunpack.c.l.b16 %v67
    %v276 = vunpack.c.l.b16 %v68
    %v277 = vunpack.c.l.b16 %v69
    %v278 = vunpack.c.l.b16 %v70
    %v279 = vunpack.c.l.b16 %v71
    %v280 = vunpack.c.l.b16 %v72
    %v281 = vunpack.c.l.b16 %v73
    %v282 = vunpack.c.l.b16 %v74
    %v283 = vunpack.c.l.b16 %v75
    %v284 = vunpack.c.l.b16 %v76
    %v285 = vunpack.c.l.b16 %v77
    %v286 = vunpack.c.l.b16 %v78
    %v287 = vunpack.c.l.b16 %v79
    %v288 = vunpack.c.l.b16 %v80
    %v289 = vunpack.c.l.b16 %v81
    %v290 = vunpack.c.l.b16 %v82
    %v291 = vunpack.c.l.b16 %v83
    %v292 = vunpack.c.l.b16 %v84
    %v293 = vunpack.c.l.b16 %v85
    %v294 = vunpack.c.l.b16 %v86
    %v295 = vunpack.c.l.b16 %v87
    %v296 = vunpack.c.l.b16 %v88
    %v297 = vunpack.c.l.b16 %v89
    %v298 = vunpack.c.l.b16 %v90
    %v299 = vunpack.c.l.b16 %v91
    %v300 = vunpack.c.l.b16 %v92
    %v301 = vunpack.c.l.b16 %v93
    %v302 = vunpack.c.l.b16 %v94
    %v303 = vunpack.c.l.b16 %v95
    %v304 = vunpack.c.l.b16 %v96
    %v305 = vunpack.c.l.b16 %v97
    %v306 = vunpack.c.l.b16 %v98
    %v307 = vunpack.c.l.b16 %v99
    %v308 = vunpack.c.l.b16 %v100
    %v309 = vunpack.c.l.b16 %v101
    %v310 = vunpack.c.l.b16 %v102
    %v311 = vunpack.c.l.b16 %v103
    %v312 = vunpack.c.l.b16 %v104
    %v313 = vpack.c.b16 %v250, %v249
    %v314 = vpack.c.b16 %v252, %v251
    %v315 = vpack.c.b16 %v254, %v253
    %v316 = vpack.c.b16 %v256, %v255
    %v317 = vpack.c.b16 %v258, %v257
    %v318 = vpack.c.b16 %v260, %v259
    %v319 = vpack.c.b16 %v262, %v261
    %v320 = vpack.c.b16 %v264, %v263
    %v321 = vpack.c.b16 %v266, %v265
    %v322 = vpack.c.b16 %v268, %v267
    %v323 = vpack.c.b16 %v270, %v269
    %v324 = vpack.c.b16 %v272, %v271
    %v325 = vpack.c.b16 %v274, %v273
    %v326 = vpack.c.b16 %v276, %v275
    %v327 = vpack.c.b16 %v278, %v277
    %v328 = vpack.c.b16 %v280, %v279
    %v329 = vpack.c.b16 %v282, %v281
    %v330 = vpack.c.b16 %v284, %v283
    %v331 = vpack.c.b16 %v286, %v285
    %v332 = vpack.c.b16 %v288, %v287
    %v333 = vpack.c.b16 %v290, %v289
    %v334 = vpack.c.b16 %v292, %v291
    %v335 = vpack.c.b16 %v294, %v293
    %v336 = vpack.c.b16 %v296, %v295
    %v337 = vpack.c.b16 %v298, %v297
    %v338 = vpack.c.b16 %v300, %v299
    %v339 = vpack.c.b16 %v302, %v301
    %v340 = vpack.c.b16 %v304, %v303
    %v341 = vpack.c.b16 %v306, %v305
    %v342 = vpack.c.b16 %v308, %v307
    %v343 = vpack.c.b16 %v310, %v309
    %v344 = vpack.c.b16 %v312, %v311
    %377 = vmatprep.subr.bf16.mxu0 0
    %378 = vmatpush1.bf16.msra.mxu0 %v313
    %379 = vmatprep.subr.bf16.mxu0 0
    %380 = vmatpush1.bf16.msra.mxu0 %v314
    %381 = vmatprep.subr.bf16.mxu0 0
    %382 = vmatpush1.bf16.msra.mxu0 %v315
    %383 = vmatprep.subr.bf16.mxu0 0
    %384 = vmatpush1.bf16.msra.mxu0 %v316
    %385 = vmatprep.subr.bf16.mxu0 0
    %386 = vmatpush1.bf16.msra.mxu0 %v317
    %387 = vmatprep.subr.bf16.mxu0 0
    %388 = vmatpush1.bf16.msra.mxu0 %v318
    %389 = vmatprep.subr.bf16.mxu0 0
    %390 = vmatpush1.bf16.msra.mxu0 %v319
    %391 = vmatprep.subr.bf16.mxu0 0
    %392 = vmatpush1.bf16.msra.mxu0 %v320
    %393 = vmatprep.subr.bf16.mxu0 0
    %394 = vmatpush1.bf16.msra.mxu0 %v321
    %395 = vmatprep.subr.bf16.mxu0 0
    %396 = vmatpush1.bf16.msra.mxu0 %v322
    %397 = vmatprep.subr.bf16.mxu0 0
    %398 = vmatpush1.bf16.msra.mxu0 %v323
    %399 = vmatprep.subr.bf16.mxu0 0
    %400 = vmatpush1.bf16.msra.mxu0 %v324
    %401 = vmatprep.subr.bf16.mxu0 0
    %402 = vmatpush1.bf16.msra.mxu0 %v325
    %403 = vmatprep.subr.bf16.mxu0 0
    %404 = vmatpush1.bf16.msra.mxu0 %v326
    %405 = vmatprep.subr.bf16.mxu0 0
    %406 = vmatpush1.bf16.msra.mxu0 %v327
    %407 = vmatprep.subr.bf16.mxu0 0
    %408 = vmatpush1.bf16.msra.mxu0 %v328
    %409 = vmatprep.mubr.bf16.mxu0 %v154
    %410 = vmatmul.mubr.bf16.gmra.mrb[0].mxu0 %v153
    %v411 = vpop.f32.mrb[0].mxu0
    %v412 = vadd.f32 0.0, %v411
    %v413 = vpop.f32.mrb[0].mxu0
    %v414 = vpop.f32.mrb[0].mxu0
    %v415 = vadd.f32 0.0, %v414
    %v416 = vpop.f32.mrb[0].mxu0
    %417 = vmatprep.mubr.bf16.mxu0 %v158
    %418 = vmatmul.mubr.bf16.gmra.mrb[0].mxu0 %v157
    %v419 = vpop.f32.mrb[0].mxu0
    %v420 = vadd.f32 0.0, %v419
    %v421 = vpop.f32.mrb[0].mxu0
    %v422 = vpop.f32.mrb[0].mxu0
    %v423 = vadd.f32 0.0, %v422
    %v424 = vpop.f32.mrb[0].mxu0
    %425 = vmatprep.mubr.bf16.mxu0 %v162
    %426 = vmatmul.mubr.bf16.gmra.mrb[0].mxu0 %v161
    %v427 = vpop.f32.mrb[0].mxu0
    %v428 = vadd.f32 0.0, %v427
    %v429 = vpop.f32.mrb[0].mxu0
    %v430 = vpop.f32.mrb[0].mxu0
    %v431 = vadd.f32 0.0, %v430
    %v432 = vpop.f32.mrb[0].mxu0
    %433 = vmatprep.mubr.bf16.mxu0 %v166
    %434 = vmatmul.mubr.bf16.gmra.mrb[0].mxu0 %v165
    %v435 = vpop.f32.mrb[0].mxu0
    %v436 = vadd.f32 0.0, %v435
    %v437 = vpop.f32.mrb[0].mxu0
    %v438 = vpop.f32.mrb[0].mxu0
    %v439 = vadd.f32 0.0, %v438
    %v440 = vpop.f32.mrb[0].mxu0
    %441 = vdwg.mxu0
    %442 = vmatprep.subr.bf16.mxu0 0
    %443 = vmatpush1.bf16.msra.mxu0 %v329
    %444 = vmatprep.subr.bf16.mxu0 0
    %445 = vmatpush1.bf16.msra.mxu0 %v330
    %446 = vmatprep.subr.bf16.mxu0 0
    %447 = vmatpush1.bf16.msra.mxu0 %v331
    %448 = vmatprep.subr.bf16.mxu0 0
    %449 = vmatpush1.bf16.msra.mxu0 %v332
    %450 = vmatprep.subr.bf16.mxu0 0
    %451 = vmatpush1.bf16.msra.mxu0 %v333
    %452 = vmatprep.subr.bf16.mxu0 0
    %453 = vmatpush1.bf16.msra.mxu0 %v334
    %454 = vmatprep.subr.bf16.mxu0 0
    %455 = vmatpush1.bf16.msra.mxu0 %v335
    %456 = vmatprep.subr.bf16.mxu0 0
    %457 = vmatpush1.bf16.msra.mxu0 %v336
    %458 = vmatprep.subr.bf16.mxu0 0
    %459 = vmatpush1.bf16.msra.mxu0 %v337
    %460 = vmatprep.subr.bf16.mxu0 0
    %461 = vmatpush1.bf16.msra.mxu0 %v338
    %462 = vmatprep.subr.bf16.mxu0 0
    %463 = vmatpush1.bf16.msra.mxu0 %v339
    %464 = vmatprep.subr.bf16.mxu0 0
    %465 = vmatpush1.bf16.msra.mxu0 %v340
    %466 = vmatprep.subr.bf16.mxu0 0
    %467 = vmatpush1.bf16.msra.mxu0 %v341
    %468 = vmatprep.subr.bf16.mxu0 0
    %469 = vmatpush1.bf16.msra.mxu0 %v342
    %470 = vmatprep.subr.bf16.mxu0 0
    %471 = vmatpush1.bf16.msra.mxu0 %v343
    %472 = vmatprep.subr.bf16.mxu0 0
    %473 = vmatpush1.bf16.msra.mxu0 %v344
    %474 = vmatprep.mubr.bf16.mxu0 %v156
    %475 = vmatmul.mubr.bf16.gmra.mrb[0].mxu0 %v155
    %v476 = vpop.f32.mrb[0].mxu0
    %v477 = vadd.f32 %v412, %v476
    %v478 = vpop.f32.mrb[0].mxu0
    %v479 = vpop.f32.mrb[0].mxu0
    %v480 = vadd.f32 %v415, %v479
    %v481 = vpop.f32.mrb[0].mxu0
    %482 = vmatprep.mubr.bf16.mxu0 %v160
    %483 = vmatmul.mubr.bf16.gmra.mrb[0].mxu0 %v159
    %v484 = vpop.f32.mrb[0].mxu0
    %v485 = vadd.f32 %v420, %v484
    %v486 = vpop.f32.mrb[0].mxu0
    %v487 = vpop.f32.mrb[0].mxu0
    %v488 = vadd.f32 %v423, %v487
    %v489 = vpop.f32.mrb[0].mxu0
    %490 = vmatprep.mubr.bf16.mxu0 %v164
    %491 = vmatmul.mubr.bf16.gmra.mrb[0].mxu0 %v163
    %v492 = vpop.f32.mrb[0].mxu0
    %v493 = vadd.f32 %v428, %v492
    %v494 = vpop.f32.mrb[0].mxu0
    %v495 = vpop.f32.mrb[0].mxu0
    %v496 = vadd.f32 %v431, %v495
    %v497 = vpop.f32.mrb[0].mxu0
    %498 = vmatprep.mubr.bf16.mxu0 %v168
    %499 = vmatmul.mubr.bf16.gmra.mrb[0].mxu0 %v167
    %v500 = vpop.f32.mrb[0].mxu0
    %v501 = vadd.f32 %v436, %v500
    %v502 = vpop.f32.mrb[0].mxu0
    %v503 = vpop.f32.mrb[0].mxu0
    %v504 = vadd.f32 %v439, %v503
    %v505 = vpop.f32.mrb[0].mxu0
    %506 = vdwg.mxu0
    %vm507 = vcmask 261120
    %v508 = vsel %vm507, %v477, 0.0
    %509 = vadd.xlane.f32.xlu0 %v508
    %v510 = vpop.xlane.xlu0 %509
    %v511 = vsel %vm507, %v480, 0.0
    %512 = vadd.xlane.f32.xlu0 %v511
    %v513 = vpop.xlane.xlu0 %512
    %v514 = vsel %vm507, %v485, 0.0
    %515 = vadd.xlane.f32.xlu0 %v514
    %v516 = vpop.xlane.xlu0 %515
    %v517 = vsel %vm507, %v488, 0.0
    %518 = vadd.xlane.f32.xlu0 %v517
    %v519 = vpop.xlane.xlu0 %518
    %v520 = vsel %vm507, %v493, 0.0
    %521 = vadd.xlane.f32.xlu0 %v520
    %v522 = vpop.xlane.xlu0 %521
    %v523 = vsel %vm507, %v496, 0.0
    %524 = vadd.xlane.f32.xlu0 %v523
    %v525 = vpop.xlane.xlu0 %524
    %v526 = vsel %vm507, %v501, 0.0
    %527 = vadd.xlane.f32.xlu0 %v526
    %v528 = vpop.xlane.xlu0 %527
    %v529 = vsel %vm507, %v504, 0.0
    %530 = vadd.xlane.f32.xlu0 %v529
    %v531 = vpop.xlane.xlu0 %530
    %v532 = vmul.f32 %v510, 0.03125
    %v533 = vmul.f32 %v513, 0.03125
    %v534 = vmul.f32 %v516, 0.03125
    %v535 = vmul.f32 %v519, 0.03125
    %v536 = vmul.f32 %v522, 0.03125
    %v537 = vmul.f32 %v525, 0.03125
    %v538 = vmul.f32 %v528, 0.03125
    %v539 = vmul.f32 %v531, 0.03125
    %v540 = vmul.f32 %v477, %v477
    %v541 = vmul.f32 %v480, %v480
    %v542 = vmul.f32 %v485, %v485
    %v543 = vmul.f32 %v488, %v488
    %v544 = vmul.f32 %v493, %v493
    %v545 = vmul.f32 %v496, %v496
    %v546 = vmul.f32 %v501, %v501
    %v547 = vmul.f32 %v504, %v504
    %v548 = vsel %vm507, %v540, 0.0
    %549 = vadd.xlane.f32.xlu0 %v548
    %v550 = vpop.xlane.xlu0 %549
    %v551 = vsel %vm507, %v541, 0.0
    %552 = vadd.xlane.f32.xlu0 %v551
    %v553 = vpop.xlane.xlu0 %552
    %v554 = vsel %vm507, %v542, 0.0
    %555 = vadd.xlane.f32.xlu0 %v554
    %v556 = vpop.xlane.xlu0 %555
    %v557 = vsel %vm507, %v543, 0.0
    %558 = vadd.xlane.f32.xlu0 %v557
    %v559 = vpop.xlane.xlu0 %558
    %v560 = vsel %vm507, %v544, 0.0
    %561 = vadd.xlane.f32.xlu0 %v560
    %v562 = vpop.xlane.xlu0 %561
    %v563 = vsel %vm507, %v545, 0.0
    %564 = vadd.xlane.f32.xlu0 %v563
    %v565 = vpop.xlane.xlu0 %564
    %v566 = vsel %vm507, %v546, 0.0
    %567 = vadd.xlane.f32.xlu0 %v566
    %v568 = vpop.xlane.xlu0 %567
    %v569 = vsel %vm507, %v547, 0.0
    %570 = vadd.xlane.f32.xlu0 %v569
    %v571 = vpop.xlane.xlu0 %570
    %v572 = vmul.f32 %v550, 0.03125
    %v573 = vmul.f32 %v553, 0.03125
    %v574 = vmul.f32 %v556, 0.03125
    %v575 = vmul.f32 %v559, 0.03125
    %v576 = vmul.f32 %v562, 0.03125
    %v577 = vmul.f32 %v565, 0.03125
    %v578 = vmul.f32 %v568, 0.03125
    %v579 = vmul.f32 %v571, 0.03125
    %v580 = vmul.f32 %v532, %v532
    %v581 = vmul.f32 %v533, %v533
    %v582 = vmul.f32 %v534, %v534
    %v583 = vmul.f32 %v535, %v535
    %v584 = vmul.f32 %v536, %v536
    %v585 = vmul.f32 %v537, %v537
    %v586 = vmul.f32 %v538, %v538
    %v587 = vmul.f32 %v539, %v539
    %v588 = vsub.f32 %v572, %v580
    %v589 = vsub.f32 %v573, %v581
    %v590 = vsub.f32 %v574, %v582
    %v591 = vsub.f32 %v575, %v583
    %v592 = vsub.f32 %v576, %v584
    %v593 = vsub.f32 %v577, %v585
    %v594 = vsub.f32 %v578, %v586
    %v595 = vsub.f32 %v579, %v587
    %v596 = vsub.f32 %v477, %v532
    %v597 = vsub.f32 %v480, %v533
    %v598 = vsub.f32 %v485, %v534
    %v599 = vsub.f32 %v488, %v535
    %v600 = vsub.f32 %v493, %v536
    %v601 = vsub.f32 %v496, %v537
    %v602 = vsub.f32 %v501, %v538
    %v603 = vsub.f32 %v504, %v539
    %v604 = vmax.f32 %v588, 0.0
    %v605 = vmax.f32 %v589, 0.0
    %v606 = vmax.f32 %v590, 0.0
    %v607 = vmax.f32 %v591, 0.0
    %v608 = vmax.f32 %v592, 0.0
    %v609 = vmax.f32 %v593, 0.0
    %v610 = vmax.f32 %v594, 0.0
    %v611 = vmax.f32 %v595, 0.0
    %v612 = vadd.f32 %v604, 1e-05
    %v613 = vadd.f32 %v605, 1e-05
    %v614 = vadd.f32 %v606, 1e-05
    %v615 = vadd.f32 %v607, 1e-05
    %v616 = vadd.f32 %v608, 1e-05
    %v617 = vadd.f32 %v609, 1e-05
    %v618 = vadd.f32 %v610, 1e-05
    %v619 = vadd.f32 %v611, 1e-05
    %v620 = vrsqrt.pop %v612
    %v621 = vrsqrt.pop %v613
    %v622 = vrsqrt.pop %v614
    %v623 = vrsqrt.pop %v615
    %v624 = vrsqrt.pop %v616
    %v625 = vrsqrt.pop %v617
    %v626 = vrsqrt.pop %v618
    %v627 = vrsqrt.pop %v619
    %v628 = vmul.f32 %v596, %v620
    %v629 = vmul.f32 %v597, %v621
    %v630 = vmul.f32 %v598, %v622
    %v631 = vmul.f32 %v599, %v623
    %v632 = vmul.f32 %v600, %v624
    %v633 = vmul.f32 %v601, %v625
    %v634 = vmul.f32 %v602, %v626
    %v635 = vmul.f32 %v603, %v627
    %v636 = vld [vmem:[%s2] sm:$0xff]
    %v637 = vld [vmem:[%s2 + $0x8] sm:$0xff]
    %v638 = vld [vmem:[%s2 + $0x10] sm:$0xff]
    %v639 = vld [vmem:[%s2 + $0x18] sm:$0xff]
    %v640 = vld [vmem:[%s2 + $0x20] sm:$0xff]
    %v641 = vld [vmem:[%s2 + $0x28] sm:$0xff]
    %v642 = vld [vmem:[%s2 + $0x30] sm:$0xff]
    %v643 = vld [vmem:[%s2 + $0x38] sm:$0xff]
    %645 = vset.pattern.permute.xlu0 0
    %646 = vperm.xlu0 %645, %v636
    %v647 = vpop.permute.xlu0 %646
    %650 = vset.pattern.permute.xlu0 0
    %651 = vperm.xlu0 %650, %v637
    %v652 = vpop.permute.xlu0 %651
    %655 = vset.pattern.permute.xlu0 0
    %656 = vperm.xlu0 %655, %v638
    %v657 = vpop.permute.xlu0 %656
    %660 = vset.pattern.permute.xlu0 0
    %661 = vperm.xlu0 %660, %v639
    %v662 = vpop.permute.xlu0 %661
    %665 = vset.pattern.permute.xlu0 0
    %666 = vperm.xlu0 %665, %v640
    %v667 = vpop.permute.xlu0 %666
    %670 = vset.pattern.permute.xlu0 0
    %671 = vperm.xlu0 %670, %v641
    %v672 = vpop.permute.xlu0 %671
    %675 = vset.pattern.permute.xlu0 0
    %676 = vperm.xlu0 %675, %v642
    %v677 = vpop.permute.xlu0 %676
    %680 = vset.pattern.permute.xlu0 0
    %681 = vperm.xlu0 %680, %v643
    %v682 = vpop.permute.xlu0 %681
    %v684 = vmul.f32 %v628, %v647
    %v685 = vmul.f32 %v629, %v652
    %v686 = vmul.f32 %v630, %v657
    %v687 = vmul.f32 %v631, %v662
    %v688 = vmul.f32 %v632, %v667
    %v689 = vmul.f32 %v633, %v672
    %v690 = vmul.f32 %v634, %v677
    %v691 = vmul.f32 %v635, %v682
    %v692 = vld [vmem:[%s3] sm:$0xff]
    %v693 = vld [vmem:[%s3 + $0x8] sm:$0xff]
    %v694 = vld [vmem:[%s3 + $0x10] sm:$0xff]
    %v695 = vld [vmem:[%s3 + $0x18] sm:$0xff]
    %v696 = vld [vmem:[%s3 + $0x20] sm:$0xff]
    %v697 = vld [vmem:[%s3 + $0x28] sm:$0xff]
    %v698 = vld [vmem:[%s3 + $0x30] sm:$0xff]
    %v699 = vld [vmem:[%s3 + $0x38] sm:$0xff]
    %701 = vset.pattern.permute.xlu0 0
    %702 = vperm.xlu0 %701, %v692
    %v703 = vpop.permute.xlu0 %702
    %706 = vset.pattern.permute.xlu0 0
    %707 = vperm.xlu0 %706, %v693
    %v708 = vpop.permute.xlu0 %707
    %711 = vset.pattern.permute.xlu0 0
    %712 = vperm.xlu0 %711, %v694
    %v713 = vpop.permute.xlu0 %712
    %716 = vset.pattern.permute.xlu0 0
    %717 = vperm.xlu0 %716, %v695
    %v718 = vpop.permute.xlu0 %717
    %721 = vset.pattern.permute.xlu0 0
    %722 = vperm.xlu0 %721, %v696
    %v723 = vpop.permute.xlu0 %722
    %726 = vset.pattern.permute.xlu0 0
    %727 = vperm.xlu0 %726, %v697
    %v728 = vpop.permute.xlu0 %727
    %731 = vset.pattern.permute.xlu0 0
    %732 = vperm.xlu0 %731, %v698
    %v733 = vpop.permute.xlu0 %732
    %736 = vset.pattern.permute.xlu0 0
    %737 = vperm.xlu0 %736, %v699
    %v738 = vpop.permute.xlu0 %737
    %v740 = vadd.f32 %v684, %v703
    %v741 = vadd.f32 %v685, %v708
    %v742 = vadd.f32 %v686, %v713
    %v743 = vadd.f32 %v687, %v718
    %v744 = vadd.f32 %v688, %v723
    %v745 = vadd.f32 %v689, %v728
    %v746 = vadd.f32 %v690, %v733
    %v747 = vadd.f32 %v691, %v738
    %v748 = vmul.f32 %v740, 0.2
    %v749 = vmul.f32 %v741, 0.2
    %v750 = vmul.f32 %v742, 0.2
    %v751 = vmul.f32 %v743, 0.2
    %v752 = vmul.f32 %v744, 0.2
    %v753 = vmul.f32 %v745, 0.2
    %v754 = vmul.f32 %v746, 0.2
    %v755 = vmul.f32 %v747, 0.2
    %v756 = vmax.f32 %v740, %v748
    %v757 = vmax.f32 %v741, %v749
    %v758 = vmax.f32 %v742, %v750
    %v759 = vmax.f32 %v743, %v751
    %v760 = vmax.f32 %v744, %v752
    %v761 = vmax.f32 %v745, %v753
    %v762 = vmax.f32 %v746, %v754
    %v763 = vmax.f32 %v747, %v755
    %v764 = vld [vmem:[%s4] sm:$0xff]
    %v765 = vld [vmem:[%s4 + $0x8] sm:$0xff]
    %v766 = vld [vmem:[%s4 + $0x10] sm:$0xff]
    %v767 = vld [vmem:[%s4 + $0x18] sm:$0xff]
    %v768 = vld [vmem:[%s4 + $0x20] sm:$0xff]
    %v769 = vld [vmem:[%s4 + $0x28] sm:$0xff]
    %v770 = vld [vmem:[%s4 + $0x30] sm:$0xff]
    %v771 = vld [vmem:[%s4 + $0x38] sm:$0xff]
    %v772 = vmul.f32 %v756, %v764
    %v773 = vmul.f32 %v757, %v765
    %v774 = vmul.f32 %v758, %v766
    %v775 = vmul.f32 %v759, %v767
    %v776 = vmul.f32 %v760, %v768
    %v777 = vmul.f32 %v761, %v769
    %v778 = vmul.f32 %v762, %v770
    %v779 = vmul.f32 %v763, %v771
    %v780 = vsel %vm507, %v772, 0.0
    %v781 = vsel %vm507, %v773, 0.0
    %v782 = vadd.f32 %v780, %v781
    %v783 = vsel %vm507, %v774, 0.0
    %v784 = vadd.f32 %v782, %v783
    %v785 = vsel %vm507, %v775, 0.0
    %v786 = vadd.f32 %v784, %v785
    %v787 = vsel %vm507, %v776, 0.0
    %v788 = vadd.f32 %v786, %v787
    %v789 = vsel %vm507, %v777, 0.0
    %v790 = vadd.f32 %v788, %v789
    %v791 = vsel %vm507, %v778, 0.0
    %v792 = vadd.f32 %v790, %v791
    %v793 = vsel %vm507, %v779, 0.0
    %v794 = vadd.f32 %v792, %v793
    %v795 = vrot.slane %v794, 4
    %v796 = vadd.f32 %v794, %v795
    %v797 = vrot.slane %v796, 2
    %v798 = vadd.f32 %v796, %v797
    %v799 = vrot.slane %v798, 1
    %v800 = vadd.f32 %v798, %v799
    %v801 = vld [vmem:[%s5] sm:$0xff]
    %v802 = vld [vmem:[%s5 + $0x8] sm:$0xff]
    %v803 = vld [vmem:[%s5 + $0x10] sm:$0xff]
    %v804 = vld [vmem:[%s5 + $0x18] sm:$0xff]
    %v806 = vsel %vm507, %v800, 0
    %808 = vmatprep.subr.mxu0 0.0
    %809 = vmatpush1.msra.mxu0 %v801
    %810 = vmatprep.subr.mxu0 0.0
    %811 = vmatpush1.msra.mxu0 %v802
    %812 = vmatprep.subr.mxu0 0.0
    %813 = vmatpush1.msra.mxu0 %v803
    %814 = vmatprep.subr.mxu0 0.0
    %815 = vmatpush1.msra.mxu0 %v804
    %816 = vmatprep.subr.mxu0 0.0
    %817 = vmatpush1.msra.mxu0 0.0
    %818 = vmatprep.subr.mxu0 0.0
    %819 = vmatpush1.msra.mxu0 0.0
    %820 = vmatprep.subr.mxu0 0.0
    %821 = vmatpush1.msra.mxu0 0.0
    %822 = vmatprep.subr.mxu0 0.0
    %823 = vmatpush1.msra.mxu0 0.0
    %824 = vmatprep.subr.mxu0 0.0
    %825 = vmatpush1.msra.mxu0 0.0
    %826 = vmatprep.subr.mxu0 0.0
    %827 = vmatpush1.msra.mxu0 0.0
    %828 = vmatprep.subr.mxu0 0.0
    %829 = vmatpush1.msra.mxu0 0.0
    %830 = vmatprep.subr.mxu0 0.0
    %831 = vmatpush1.msra.mxu0 0.0
    %832 = vmatprep.subr.mxu0 0.0
    %833 = vmatpush1.msra.mxu0 0.0
    %834 = vmatprep.subr.mxu0 0.0
    %835 = vmatpush1.msra.mxu0 0.0
    %836 = vmatprep.subr.mxu0 0.0
    %837 = vmatpush1.msra.mxu0 0.0
    %838 = vmatprep.subr.mxu0 0.0
    %839 = vmatpush1.msra.mxu0 0.0
    %840 = vmatprep.subr.mxu0 0.0
    %841 = vmatpush1.msra.mxu0 0.0
    %842 = vmatprep.subr.mxu0 0.0
    %843 = vmatpush1.msra.mxu0 0.0
    %844 = vmatprep.subr.mxu0 0.0
    %845 = vmatpush1.msra.mxu0 0.0
    %846 = vmatprep.subr.mxu0 0.0
    %847 = vmatpush1.msra.mxu0 0.0
    %848 = vmatprep.subr.mxu0 0.0
    %849 = vmatpush1.msra.mxu0 0.0
    %850 = vmatprep.subr.mxu0 0.0
    %851 = vmatpush1.msra.mxu0 0.0
    %852 = vmatprep.subr.mxu0 0.0
    %853 = vmatpush1.msra.mxu0 0.0
    %854 = vmatprep.subr.mxu0 0.0
    %855 = vmatpush1.msra.mxu0 0.0
    %856 = vmatprep.subr.mxu0 0.0
    %857 = vmatpush1.msra.mxu0 0.0
    %858 = vmatprep.subr.mxu0 0.0
    %859 = vmatpush1.msra.mxu0 0.0
    %860 = vmatprep.subr.mxu0 0.0
    %861 = vmatpush1.msra.mxu0 0.0
    %862 = vmatprep.subr.mxu0 0.0
    %863 = vmatpush1.msra.mxu0 0.0
    %864 = vmatprep.subr.mxu0 0.0
    %865 = vmatpush1.msra.mxu0 0.0
    %866 = vmatprep.subr.mxu0 0.0
    %867 = vmatpush1.msra.mxu0 0.0
    %868 = vmatprep.subr.mxu0 0.0
    %869 = vmatpush1.msra.mxu0 0.0
    %870 = vmatprep.subr.mxu0 0.0
    %871 = vmatpush1.msra.mxu0 0.0
    %872 = vmatprep.mubr.f32.mxu0 0.0
    %873 = vmatmul.mubr.f32.gmra.mrb[0].mxu0 %v806
    %v874 = vpop.f32.mrb[0].mxu0
    %v875 = vadd.f32 0.0, %v874
    %v876 = vpop.f32.mrb[0].mxu0
    %877 = vdwg.mxu0
    %vm878 = vcmask 8192
    %879 = vst.msk [vmem:[#allocation2] sm:$0x1] %vm878, %v875
    // Predicated region
    $region26: #{dnet_forward.7} parent=1 // pred_check
      _
    $region27: #{dnet_forward.7} parent=1 // pred_check_branch
      %881 = sbr.rel (0) target = $region29
    $region28: #{dnet_forward.7} parent=1 // pred_region
      %s883 = ssub.s32 16, 16
      %884 = vsyncadd [#allocation3], %s883
      %s886 = sshll.u32 [#allocation2], 4
      %s887 = int_to_ptr.vmem [resolvable:$true] %s886
      %889 = dma.vmem_to_hbm [thread:$0]  %s887, 16, %s6, [#allocation3]
    $region29: #{dnet_forward.7} parent=1 // pred_fallthru
      _
    // Predicated region
    $region30: #{dnet_forward.7} parent=1 // pred_check
      _
    $region31: #{dnet_forward.7} parent=1 // pred_check_branch
      %891 = sbr.rel (0) target = $region33
    $region32: #{dnet_forward.7} parent=1 // pred_region
      %892 = dma.done [#allocation3], 16
    $region33: #{dnet_forward.7} parent=1 // pred_fallthru
      _
    %893 = vsyncpa [#allocation3], 1

</llo_original>
